<compile_context>
chip_gen: v5e
topology: v5e:2x2
jax: 0.10.0
libtpu: 0.0.40
codegen_flags: <defaults>
</compile_context>

<pallas_src>
import jax
import jax.numpy as jnp
import numpy as np
from jax.experimental import pallas as pl
from jax.experimental.pallas import tpu as pltpu


def _make_kernel(num_layers, hidden_size, vocab_size, sos_token_id, max_length,
                 batch):
    H = hidden_size
    V = vocab_size
    L = num_layers

    def kernel(*refs):
        h0_ref, c0_ref, emb_w0_ref = refs[0], refs[1], refs[2]
        base = 3
        w_ih_refs = refs[base:base + (L - 1)]        # layers 1..L-1: (H, 4H)
        base += (L - 1)
        w_hh_refs = refs[base:base + L]              # (H, 4H) each
        base += L
        b_refs = refs[base:base + L]                 # (1, 4H) each (pre-scaled)
        base += L
        fc_w_ref = refs[base]                        # (H, V)
        fc_b_ref = refs[base + 1]                    # (1, V)
        out_ref = refs[base + 2]                     # (T, B, V)

        # ---------------- loop-invariant hoists ----------------
        lane_v = jax.lax.broadcasted_iota(jnp.int32, (batch, V), 1)
        emb_w0 = emb_w0_ref[...]                                     # (V, 4H)
        w_ih = [w_ih_refs[l][...] for l in range(L - 1)]
        w_hh = [w_hh_refs[l][...] for l in range(L)]
        bias = [jnp.broadcast_to(b_refs[l][...], (batch, 4 * H)) for l in range(L)]
        fc_w = fc_w_ref[...]
        fc_b = jnp.broadcast_to(fc_b_ref[...], (batch, V))

        tok0 = jnp.where(lane_v == sos_token_id, 1.0, 0.0).astype(jnp.float32)
        h0 = tuple(h0_ref[l] for l in range(L))
        c0 = tuple(c0_ref[l] for l in range(L))

        def lstm_cell(x_path, h_prev, c_prev, w_hh_l, b_l):
            # x_path already includes x @ w_ih (pre-scaled columns).
            gates = x_path + jnp.dot(h_prev, w_hh_l,
                                     preferred_element_type=jnp.float32) + b_l
            t = jnp.tanh(gates)                      # single whole-vreg EUP op
            i_g = 0.5 * t[:, 0 * H:1 * H] + 0.5      # sigmoid via tanh identity
            f_g = 0.5 * t[:, 1 * H:2 * H] + 0.5
            g_g = t[:, 2 * H:3 * H]
            o_g = 0.5 * t[:, 3 * H:4 * H] + 0.5
            c_new = f_g * c_prev + i_g * g_g
            h_new = o_g * jnp.tanh(c_new)
            return h_new, c_new

        def step(t, carry):
            h, c, tok = carry
            new_h, new_c = [], []

            # Layer 0: embedding folded into the input weights.
            x_path = jnp.dot(tok, emb_w0, preferred_element_type=jnp.float32)
            h_new, c_new = lstm_cell(x_path, h[0], c[0], w_hh[0], bias[0])
            new_h.append(h_new)
            new_c.append(c_new)
            x = h_new

            for l in range(1, L):
                x_path = jnp.dot(x, w_ih[l - 1],
                                 preferred_element_type=jnp.float32)
                h_new, c_new = lstm_cell(x_path, h[l], c[l], w_hh[l], bias[l])
                new_h.append(h_new)
                new_c.append(c_new)
                x = h_new

            logits = jnp.dot(x, fc_w, preferred_element_type=jnp.float32) + fc_b
            out_ref[t] = logits                       # (8,128) unmasked store

            # Greedy argmax (lowest-index tie-break, matching torch.topk).
            max_v = jnp.max(logits, axis=-1, keepdims=True)
            idx = jnp.min(jnp.where(logits == max_v, lane_v, V),
                          axis=-1, keepdims=True)
            tok_next = jnp.where(lane_v == idx, 1.0, 0.0).astype(jnp.float32)
            return tuple(new_h), tuple(new_c), tok_next

        # T is small and static: fully unroll for cross-step scheduling.
        jax.lax.fori_loop(0, max_length, step, (h0, c0, tok0), unroll=True)

    return kernel


def lstm_decoder_forward(emb_table, h0, c0, layer_params, fc_w_t, fc_b,
                         sos_token_id, max_length):
    """layer_params: list of (w_ih_t, w_hh_t, b_ih, b_hh) per layer (pre-transposed)."""
    num_layers, batch, hidden = h0.shape
    vocab, _embed = emb_table.shape
    H = hidden

    # Column scaling for sigmoid-via-tanh: 0.5 on i/f/o gate columns, 1.0 on g.
    col_scale = jnp.concatenate([
        jnp.full((H,), 0.5, jnp.float32),
        jnp.full((H,), 0.5, jnp.float32),
        jnp.ones((H,), jnp.float32),
        jnp.full((H,), 0.5, jnp.float32),
    ])[None, :]                                                       # (1, 4H)

    w_ih_list, w_hh_list, b_list = [], [], []
    for (w_ih_t, w_hh_t, b_ih, b_hh) in layer_params:
        w_ih_list.append(w_ih_t * col_scale)
        w_hh_list.append(w_hh_t * col_scale)
        b_list.append((b_ih + b_hh) * col_scale)

    # Fold the embedding table into layer-0 input weights: (V,E)@(E,4H)->(V,4H).
    emb_w0 = emb_table @ w_ih_list[0]

    inputs = [h0, c0, emb_w0, *w_ih_list[1:], *w_hh_list, *b_list, fc_w_t, fc_b]

    kernel = _make_kernel(num_layers, hidden, vocab, sos_token_id, max_length,
                          batch)

    vmem = pltpu.MemorySpace.VMEM
    out_tbv = pl.pallas_call(
        kernel,
        out_shape=jax.ShapeDtypeStruct((max_length, batch, vocab), jnp.float32),
        in_specs=[pl.BlockSpec(memory_space=vmem) for _ in inputs],
        out_specs=pl.BlockSpec(memory_space=vmem),
    )(*inputs)

    # (T, B, V) -> (B, T, V), matching PyTorch (batch, max_length, vocab_size).
    return jnp.transpose(out_tbv, (1, 0, 2))


def reference_forward(emb_table, h0, c0, layer_params, fc_w_t, fc_b,
                      sos_token_id, max_length):
    """Pure-JAX reference replicating the PyTorch module's forward semantics."""
    num_layers, batch, hidden = h0.shape
    tok = jnp.full((batch,), sos_token_id, dtype=jnp.int32)
    h, c = h0, c0
    outs = []
    for _ in range(max_length):
        x = emb_table[tok]  # (B, E)
        new_h, new_c = [], []
        for layer, (w_ih_t, w_hh_t, b_ih, b_hh) in enumerate(layer_params):
            gates = x @ w_ih_t + h[layer] @ w_hh_t + b_ih[0] + b_hh[0]
            i_g = jax.nn.sigmoid(gates[:, 0 * hidden:1 * hidden])
            f_g = jax.nn.sigmoid(gates[:, 1 * hidden:2 * hidden])
            g_g = jnp.tanh(gates[:, 2 * hidden:3 * hidden])
            o_g = jax.nn.sigmoid(gates[:, 3 * hidden:4 * hidden])
            cn = f_g * c[layer] + i_g * g_g
            hn = o_g * jnp.tanh(cn)
            new_h.append(hn)
            new_c.append(cn)
            x = hn
        h = jnp.stack(new_h)
        c = jnp.stack(new_c)
        logits = x @ fc_w_t + fc_b[0]
        outs.append(logits)
        tok = jnp.argmax(logits, axis=-1).astype(jnp.int32)
    return jnp.stack(outs, axis=1)  # (B, T, V)


if __name__ == "__main__":
    # Small shapes consistent with the module.
    VOCAB = 128        # embed_model.vocab_size (lane-friendly)
    EMBED = 32         # embed_model.embedding_dim
    HIDDEN = 32        # hidden_size  (4H = 128 -> one vreg of gates)
    NUM_LAYERS = 2     # num_layers
    BATCH = 8          # fills the 8 sublanes of a vreg
    MAX_LENGTH = 8
    SOS_TOKEN_ID = 3   # key_to_index['<UNK>'] (synthetic)

    key = jax.random.PRNGKey(0)
    keys = jax.random.split(key, 4 + 4 * NUM_LAYERS)
    ki = iter(keys)

    scale = 0.1
    emb_table = jax.random.normal(next(ki), (VOCAB, EMBED), jnp.float32) * scale
    h0 = jax.random.normal(next(ki), (NUM_LAYERS, BATCH, HIDDEN), jnp.float32) * scale
    c0 = jax.random.normal(next(ki), (NUM_LAYERS, BATCH, HIDDEN), jnp.float32) * scale

    layer_params = []
    for layer in range(NUM_LAYERS):
        in_dim = EMBED if layer == 0 else HIDDEN
        w_ih_t = jax.random.normal(next(ki), (in_dim, 4 * HIDDEN), jnp.float32) * scale
        w_hh_t = jax.random.normal(next(ki), (HIDDEN, 4 * HIDDEN), jnp.float32) * scale
        b_ih = jax.random.normal(next(ki), (1, 4 * HIDDEN), jnp.float32) * scale
        b_hh = jax.random.normal(next(ki), (1, 4 * HIDDEN), jnp.float32) * scale
        layer_params.append((w_ih_t, w_hh_t, b_ih, b_hh))

    fc_w_t = jax.random.normal(next(ki), (HIDDEN, VOCAB), jnp.float32) * scale
    fc_b = jnp.zeros((1, VOCAB), jnp.float32)

    out = lstm_decoder_forward(emb_table, h0, c0, layer_params, fc_w_t, fc_b,
                               SOS_TOKEN_ID, MAX_LENGTH)
    out = jax.block_until_ready(out)

    ref = reference_forward(emb_table, h0, c0, layer_params, fc_w_t, fc_b,
                            SOS_TOKEN_ID, MAX_LENGTH)
    ref = jax.block_until_ready(ref)

    assert out.shape == (BATCH, MAX_LENGTH, VOCAB), out.shape
    np.testing.assert_allclose(np.asarray(out), np.asarray(ref), rtol=2e-3, atol=2e-3)

    print("KERNEL_OK")
</pallas_src>

<mosaic_0001>
module attributes {stable_mosaic.version = 11 : i64} {
  func.func @kernel(%arg0: memref<2x8x32xf32, #tpu.memory_space<vmem>>, %arg1: memref<2x8x32xf32, #tpu.memory_space<vmem>>, %arg2: memref<128x128xf32, #tpu.memory_space<vmem>>, %arg3: memref<32x128xf32, #tpu.memory_space<vmem>>, %arg4: memref<32x128xf32, #tpu.memory_space<vmem>>, %arg5: memref<32x128xf32, #tpu.memory_space<vmem>>, %arg6: memref<1x128xf32, #tpu.memory_space<vmem>>, %arg7: memref<1x128xf32, #tpu.memory_space<vmem>>, %arg8: memref<32x128xf32, #tpu.memory_space<vmem>>, %arg9: memref<1x128xf32, #tpu.memory_space<vmem>>, %arg10: memref<8x8x128xf32, #tpu.memory_space<vmem>>) attributes {dimension_semantics = [], scalar_prefetch = 0 : i64, scratch_operands = 0 : i64, tpu.core_type = #tpu.core_type<tc>} {
    %0 = tpu.iota {dimensions = array<i32: 1>} : vector<8x128xi32>
    %c0 = arith.constant 0 : index
    %c0_0 = arith.constant 0 : index
    %1 = vector.load %arg2[%c0, %c0_0] : memref<128x128xf32, #tpu.memory_space<vmem>>, vector<128x128xf32>
    %c0_1 = arith.constant 0 : index
    %c0_2 = arith.constant 0 : index
    %2 = vector.load %arg3[%c0_1, %c0_2] : memref<32x128xf32, #tpu.memory_space<vmem>>, vector<32x128xf32>
    %c0_3 = arith.constant 0 : index
    %c0_4 = arith.constant 0 : index
    %3 = vector.load %arg4[%c0_3, %c0_4] : memref<32x128xf32, #tpu.memory_space<vmem>>, vector<32x128xf32>
    %c0_5 = arith.constant 0 : index
    %c0_6 = arith.constant 0 : index
    %4 = vector.load %arg5[%c0_5, %c0_6] : memref<32x128xf32, #tpu.memory_space<vmem>>, vector<32x128xf32>
    %c0_7 = arith.constant 0 : index
    %c0_8 = arith.constant 0 : index
    %5 = vector.load %arg6[%c0_7, %c0_8] : memref<1x128xf32, #tpu.memory_space<vmem>>, vector<1x128xf32>
    %6 = vector.shape_cast %5 : vector<1x128xf32> to vector<1x128xf32>
    %7 = vector.broadcast %6 : vector<1x128xf32> to vector<8x128xf32>
    %c0_9 = arith.constant 0 : index
    %c0_10 = arith.constant 0 : index
    %8 = vector.load %arg7[%c0_9, %c0_10] : memref<1x128xf32, #tpu.memory_space<vmem>>, vector<1x128xf32>
    %9 = vector.shape_cast %8 : vector<1x128xf32> to vector<1x128xf32>
    %10 = vector.broadcast %9 : vector<1x128xf32> to vector<8x128xf32>
    %c0_11 = arith.constant 0 : index
    %c0_12 = arith.constant 0 : index
    %11 = vector.load %arg8[%c0_11, %c0_12] : memref<32x128xf32, #tpu.memory_space<vmem>>, vector<32x128xf32>
    %c0_13 = arith.constant 0 : index
    %c0_14 = arith.constant 0 : index
    %12 = vector.load %arg9[%c0_13, %c0_14] : memref<1x128xf32, #tpu.memory_space<vmem>>, vector<1x128xf32>
    %13 = vector.shape_cast %12 : vector<1x128xf32> to vector<1x128xf32>
    %14 = vector.broadcast %13 : vector<1x128xf32> to vector<8x128xf32>
    %c3_i32 = arith.constant 3 : i32
    %15 = vector.broadcast %c3_i32 : i32 to vector<8x128xi32>
    %16 = arith.cmpi eq, %0, %15 : vector<8x128xi32>
    %cst = arith.constant 1.000000e+00 : f32
    %cst_15 = arith.constant 0.000000e+00 : f32
    %17 = vector.broadcast %cst : f32 to vector<8x128xf32>
    %18 = vector.broadcast %cst_15 : f32 to vector<8x128xf32>
    %19 = arith.select %16, %17, %18 : vector<8x128xi1>, vector<8x128xf32>
    %c0_16 = arith.constant 0 : index
    %c0_17 = arith.constant 0 : index
    %c0_18 = arith.constant 0 : index
    %20 = vector.load %arg0[%c0_16, %c0_17, %c0_18] : memref<2x8x32xf32, #tpu.memory_space<vmem>>, vector<1x8x32xf32>
    %21 = vector.shape_cast %20 : vector<1x8x32xf32> to vector<8x32xf32>
    %c1 = arith.constant 1 : index
    %c0_19 = arith.constant 0 : index
    %c0_20 = arith.constant 0 : index
    %22 = vector.load %arg0[%c1, %c0_19, %c0_20] : memref<2x8x32xf32, #tpu.memory_space<vmem>>, vector<1x8x32xf32>
    %23 = vector.shape_cast %22 : vector<1x8x32xf32> to vector<8x32xf32>
    %c0_21 = arith.constant 0 : index
    %c0_22 = arith.constant 0 : index
    %c0_23 = arith.constant 0 : index
    %24 = vector.load %arg1[%c0_21, %c0_22, %c0_23] : memref<2x8x32xf32, #tpu.memory_space<vmem>>, vector<1x8x32xf32>
    %25 = vector.shape_cast %24 : vector<1x8x32xf32> to vector<8x32xf32>
    %c1_24 = arith.constant 1 : index
    %c0_25 = arith.constant 0 : index
    %c0_26 = arith.constant 0 : index
    %26 = vector.load %arg1[%c1_24, %c0_25, %c0_26] : memref<2x8x32xf32, #tpu.memory_space<vmem>>, vector<1x8x32xf32>
    %27 = vector.shape_cast %26 : vector<1x8x32xf32> to vector<8x32xf32>
    %c0_i32 = arith.constant 0 : i32
    %cst_27 = arith.constant dense<0.000000e+00> : vector<8x128xf32>
    %28 = tpu.matmul %19, %1, %cst_27 {dimension_numbers = #tpu.dot_dimension_numbers<[1], [0], [0], [1], [0, 0, 1, 1], [], []>} : vector<8x128xf32>, vector<128x128xf32>, vector<8x128xf32> -> vector<8x128xf32>
    %cst_28 = arith.constant dense<0.000000e+00> : vector<8x128xf32>
    %29 = tpu.matmul %21, %3, %cst_28 {dimension_numbers = #tpu.dot_dimension_numbers<[1], [0], [0], [1], [0, 0, 1, 1], [], []>} : vector<8x32xf32>, vector<32x128xf32>, vector<8x128xf32> -> vector<8x128xf32>
    %30 = arith.addf %28, %29 : vector<8x128xf32>
    %31 = arith.addf %30, %7 : vector<8x128xf32>
    %32 = math.tanh %31 : vector<8x128xf32>
    %33 = vector.extract_strided_slice %32 {offsets = [0, 0], sizes = [8, 32], strides = [1, 1]} : vector<8x128xf32> to vector<8x32xf32>
    %cst_29 = arith.constant 5.000000e-01 : f32
    %34 = vector.broadcast %cst_29 : f32 to vector<8x32xf32>
    %35 = arith.mulf %34, %33 : vector<8x32xf32>
    %cst_30 = arith.constant 5.000000e-01 : f32
    %36 = vector.broadcast %cst_30 : f32 to vector<8x32xf32>
    %37 = arith.addf %35, %36 : vector<8x32xf32>
    %38 = vector.extract_strided_slice %32 {offsets = [0, 32], sizes = [8, 32], strides = [1, 1]} : vector<8x128xf32> to vector<8x32xf32>
    %cst_31 = arith.constant 5.000000e-01 : f32
    %39 = vector.broadcast %cst_31 : f32 to vector<8x32xf32>
    %40 = arith.mulf %39, %38 : vector<8x32xf32>
    %cst_32 = arith.constant 5.000000e-01 : f32
    %41 = vector.broadcast %cst_32 : f32 to vector<8x32xf32>
    %42 = arith.addf %40, %41 : vector<8x32xf32>
    %43 = vector.extract_strided_slice %32 {offsets = [0, 64], sizes = [8, 32], strides = [1, 1]} : vector<8x128xf32> to vector<8x32xf32>
    %44 = vector.extract_strided_slice %32 {offsets = [0, 96], sizes = [8, 32], strides = [1, 1]} : vector<8x128xf32> to vector<8x32xf32>
    %cst_33 = arith.constant 5.000000e-01 : f32
    %45 = vector.broadcast %cst_33 : f32 to vector<8x32xf32>
    %46 = arith.mulf %45, %44 : vector<8x32xf32>
    %cst_34 = arith.constant 5.000000e-01 : f32
    %47 = vector.broadcast %cst_34 : f32 to vector<8x32xf32>
    %48 = arith.addf %46, %47 : vector<8x32xf32>
    %49 = arith.mulf %42, %25 : vector<8x32xf32>
    %50 = arith.mulf %37, %43 : vector<8x32xf32>
    %51 = arith.addf %49, %50 : vector<8x32xf32>
    %52 = math.tanh %51 : vector<8x32xf32>
    %53 = arith.mulf %48, %52 : vector<8x32xf32>
    %cst_35 = arith.constant dense<0.000000e+00> : vector<8x128xf32>
    %54 = tpu.matmul %53, %2, %cst_35 {dimension_numbers = #tpu.dot_dimension_numbers<[1], [0], [0], [1], [0, 0, 1, 1], [], []>} : vector<8x32xf32>, vector<32x128xf32>, vector<8x128xf32> -> vector<8x128xf32>
    %cst_36 = arith.constant dense<0.000000e+00> : vector<8x128xf32>
    %55 = tpu.matmul %23, %4, %cst_36 {dimension_numbers = #tpu.dot_dimension_numbers<[1], [0], [0], [1], [0, 0, 1, 1], [], []>} : vector<8x32xf32>, vector<32x128xf32>, vector<8x128xf32> -> vector<8x128xf32>
    %56 = arith.addf %54, %55 : vector<8x128xf32>
    %57 = arith.addf %56, %10 : vector<8x128xf32>
    %58 = math.tanh %57 : vector<8x128xf32>
    %59 = vector.extract_strided_slice %58 {offsets = [0, 0], sizes = [8, 32], strides = [1, 1]} : vector<8x128xf32> to vector<8x32xf32>
    %cst_37 = arith.constant 5.000000e-01 : f32
    %60 = vector.broadcast %cst_37 : f32 to vector<8x32xf32>
    %61 = arith.mulf %60, %59 : vector<8x32xf32>
    %cst_38 = arith.constant 5.000000e-01 : f32
    %62 = vector.broadcast %cst_38 : f32 to vector<8x32xf32>
    %63 = arith.addf %61, %62 : vector<8x32xf32>
    %64 = vector.extract_strided_slice %58 {offsets = [0, 32], sizes = [8, 32], strides = [1, 1]} : vector<8x128xf32> to vector<8x32xf32>
    %cst_39 = arith.constant 5.000000e-01 : f32
    %65 = vector.broadcast %cst_39 : f32 to vector<8x32xf32>
    %66 = arith.mulf %65, %64 : vector<8x32xf32>
    %cst_40 = arith.constant 5.000000e-01 : f32
    %67 = vector.broadcast %cst_40 : f32 to vector<8x32xf32>
    %68 = arith.addf %66, %67 : vector<8x32xf32>
    %69 = vector.extract_strided_slice %58 {offsets = [0, 64], sizes = [8, 32], strides = [1, 1]} : vector<8x128xf32> to vector<8x32xf32>
    %70 = vector.extract_strided_slice %58 {offsets = [0, 96], sizes = [8, 32], strides = [1, 1]} : vector<8x128xf32> to vector<8x32xf32>
    %cst_41 = arith.constant 5.000000e-01 : f32
    %71 = vector.broadcast %cst_41 : f32 to vector<8x32xf32>
    %72 = arith.mulf %71, %70 : vector<8x32xf32>
    %cst_42 = arith.constant 5.000000e-01 : f32
    %73 = vector.broadcast %cst_42 : f32 to vector<8x32xf32>
    %74 = arith.addf %72, %73 : vector<8x32xf32>
    %75 = arith.mulf %68, %27 : vector<8x32xf32>
    %76 = arith.mulf %63, %69 : vector<8x32xf32>
    %77 = arith.addf %75, %76 : vector<8x32xf32>
    %78 = math.tanh %77 : vector<8x32xf32>
    %79 = arith.mulf %74, %78 : vector<8x32xf32>
    %cst_43 = arith.constant dense<0.000000e+00> : vector<8x128xf32>
    %80 = tpu.matmul %79, %11, %cst_43 {dimension_numbers = #tpu.dot_dimension_numbers<[1], [0], [0], [1], [0, 0, 1, 1], [], []>} : vector<8x32xf32>, vector<32x128xf32>, vector<8x128xf32> -> vector<8x128xf32>
    %81 = arith.addf %80, %14 : vector<8x128xf32>
    %82 = arith.index_cast %c0_i32 : i32 to index
    %c0_44 = arith.constant 0 : index
    %c0_45 = arith.constant 0 : index
    %83 = vector.load %arg10[%82, %c0_44, %c0_45] : memref<8x8x128xf32, #tpu.memory_space<vmem>>, vector<1x8x128xf32>
    %84 = vector.shape_cast %83 : vector<1x8x128xf32> to vector<8x128xf32>
    %85 = vector.shape_cast %81 : vector<8x128xf32> to vector<1x8x128xf32>
    tpu.vector_store %arg10[%82, %c0_44, %c0_45], %85 {strides = array<i32>} : memref<8x8x128xf32, #tpu.memory_space<vmem>>, vector<1x8x128xf32>,
    %cst_46 = arith.constant dense<0xFF800000> : vector<8xf32>
    %86 = vector.multi_reduction <maximumf>, %81, %cst_46 [1] : vector<8x128xf32> to vector<8xf32>
    %87 = vector.shape_cast %86 : vector<8xf32> to vector<8x1xf32>
    %88 = vector.broadcast %87 : vector<8x1xf32> to vector<8x128xf32>
    %89 = arith.cmpf oeq, %81, %88 : vector<8x128xf32>
    %c128_i32 = arith.constant 128 : i32
    %90 = vector.broadcast %c128_i32 : i32 to vector<8x128xi32>
    %91 = arith.select %89, %0, %90 : vector<8x128xi1>, vector<8x128xi32>
    %cst_47 = arith.constant dense<2147483647> : vector<8xi32>
    %92 = vector.multi_reduction <minsi>, %91, %cst_47 [1] : vector<8x128xi32> to vector<8xi32>
    %93 = vector.shape_cast %92 : vector<8xi32> to vector<8x1xi32>
    %94 = vector.broadcast %93 : vector<8x1xi32> to vector<8x128xi32>
    %95 = arith.cmpi eq, %0, %94 : vector<8x128xi32>
    %cst_48 = arith.constant 1.000000e+00 : f32
    %cst_49 = arith.constant 0.000000e+00 : f32
    %96 = vector.broadcast %cst_48 : f32 to vector<8x128xf32>
    %97 = vector.broadcast %cst_49 : f32 to vector<8x128xf32>
    %98 = arith.select %95, %96, %97 : vector<8x128xi1>, vector<8x128xf32>
    %c1_i32 = arith.constant 1 : i32
    %cst_50 = arith.constant dense<0.000000e+00> : vector<8x128xf32>
    %99 = tpu.matmul %98, %1, %cst_50 {dimension_numbers = #tpu.dot_dimension_numbers<[1], [0], [0], [1], [0, 0, 1, 1], [], []>} : vector<8x128xf32>, vector<128x128xf32>, vector<8x128xf32> -> vector<8x128xf32>
    %cst_51 = arith.constant dense<0.000000e+00> : vector<8x128xf32>
    %100 = tpu.matmul %53, %3, %cst_51 {dimension_numbers = #tpu.dot_dimension_numbers<[1], [0], [0], [1], [0, 0, 1, 1], [], []>} : vector<8x32xf32>, vector<32x128xf32>, vector<8x128xf32> -> vector<8x128xf32>
    %101 = arith.addf %99, %100 : vector<8x128xf32>
    %102 = arith.addf %101, %7 : vector<8x128xf32>
    %103 = math.tanh %102 : vector<8x128xf32>
    %104 = vector.extract_strided_slice %103 {offsets = [0, 0], sizes = [8, 32], strides = [1, 1]} : vector<8x128xf32> to vector<8x32xf32>
    %cst_52 = arith.constant 5.000000e-01 : f32
    %105 = vector.broadcast %cst_52 : f32 to vector<8x32xf32>
    %106 = arith.mulf %105, %104 : vector<8x32xf32>
    %cst_53 = arith.constant 5.000000e-01 : f32
    %107 = vector.broadcast %cst_53 : f32 to vector<8x32xf32>
    %108 = arith.addf %106, %107 : vector<8x32xf32>
    %109 = vector.extract_strided_slice %103 {offsets = [0, 32], sizes = [8, 32], strides = [1, 1]} : vector<8x128xf32> to vector<8x32xf32>
    %cst_54 = arith.constant 5.000000e-01 : f32
    %110 = vector.broadcast %cst_54 : f32 to vector<8x32xf32>
    %111 = arith.mulf %110, %109 : vector<8x32xf32>
    %cst_55 = arith.constant 5.000000e-01 : f32
    %112 = vector.broadcast %cst_55 : f32 to vector<8x32xf32>
    %113 = arith.addf %111, %112 : vector<8x32xf32>
    %114 = vector.extract_strided_slice %103 {offsets = [0, 64], sizes = [8, 32], strides = [1, 1]} : vector<8x128xf32> to vector<8x32xf32>
    %115 = vector.extract_strided_slice %103 {offsets = [0, 96], sizes = [8, 32], strides = [1, 1]} : vector<8x128xf32> to vector<8x32xf32>
    %cst_56 = arith.constant 5.000000e-01 : f32
    %116 = vector.broadcast %cst_56 : f32 to vector<8x32xf32>
    %117 = arith.mulf %116, %115 : vector<8x32xf32>
    %cst_57 = arith.constant 5.000000e-01 : f32
    %118 = vector.broadcast %cst_57 : f32 to vector<8x32xf32>
    %119 = arith.addf %117, %118 : vector<8x32xf32>
    %120 = arith.mulf %113, %51 : vector<8x32xf32>
    %121 = arith.mulf %108, %114 : vector<8x32xf32>
    %122 = arith.addf %120, %121 : vector<8x32xf32>
    %123 = math.tanh %122 : vector<8x32xf32>
    %124 = arith.mulf %119, %123 : vector<8x32xf32>
    %cst_58 = arith.constant dense<0.000000e+00> : vector<8x128xf32>
    %125 = tpu.matmul %124, %2, %cst_58 {dimension_numbers = #tpu.dot_dimension_numbers<[1], [0], [0], [1], [0, 0, 1, 1], [], []>} : vector<8x32xf32>, vector<32x128xf32>, vector<8x128xf32> -> vector<8x128xf32>
    %cst_59 = arith.constant dense<0.000000e+00> : vector<8x128xf32>
    %126 = tpu.matmul %79, %4, %cst_59 {dimension_numbers = #tpu.dot_dimension_numbers<[1], [0], [0], [1], [0, 0, 1, 1], [], []>} : vector<8x32xf32>, vector<32x128xf32>, vector<8x128xf32> -> vector<8x128xf32>
    %127 = arith.addf %125, %126 : vector<8x128xf32>
    %128 = arith.addf %127, %10 : vector<8x128xf32>
    %129 = math.tanh %128 : vector<8x128xf32>
    %130 = vector.extract_strided_slice %129 {offsets = [0, 0], sizes = [8, 32], strides = [1, 1]} : vector<8x128xf32> to vector<8x32xf32>
    %cst_60 = arith.constant 5.000000e-01 : f32
    %131 = vector.broadcast %cst_60 : f32 to vector<8x32xf32>
    %132 = arith.mulf %131, %130 : vector<8x32xf32>
    %cst_61 = arith.constant 5.000000e-01 : f32
    %133 = vector.broadcast %cst_61 : f32 to vector<8x32xf32>
    %134 = arith.addf %132, %133 : vector<8x32xf32>
    %135 = vector.extract_strided_slice %129 {offsets = [0, 32], sizes = [8, 32], strides = [1, 1]} : vector<8x128xf32> to vector<8x32xf32>
    %cst_62 = arith.constant 5.000000e-01 : f32
    %136 = vector.broadcast %cst_62 : f32 to vector<8x32xf32>
    %137 = arith.mulf %136, %135 : vector<8x32xf32>
    %cst_63 = arith.constant 5.000000e-01 : f32
    %138 = vector.broadcast %cst_63 : f32 to vector<8x32xf32>
    %139 = arith.addf %137, %138 : vector<8x32xf32>
    %140 = vector.extract_strided_slice %129 {offsets = [0, 64], sizes = [8, 32], strides = [1, 1]} : vector<8x128xf32> to vector<8x32xf32>
    %141 = vector.extract_strided_slice %129 {offsets = [0, 96], sizes = [8, 32], strides = [1, 1]} : vector<8x128xf32> to vector<8x32xf32>
    %cst_64 = arith.constant 5.000000e-01 : f32
    %142 = vector.broadcast %cst_64 : f32 to vector<8x32xf32>
    %143 = arith.mulf %142, %141 : vector<8x32xf32>
    %cst_65 = arith.constant 5.000000e-01 : f32
    %144 = vector.broadcast %cst_65 : f32 to vector<8x32xf32>
    %145 = arith.addf %143, %144 : vector<8x32xf32>
    %146 = arith.mulf %139, %77 : vector<8x32xf32>
    %147 = arith.mulf %134, %140 : vector<8x32xf32>
    %148 = arith.addf %146, %147 : vector<8x32xf32>
    %149 = math.tanh %148 : vector<8x32xf32>
    %150 = arith.mulf %145, %149 : vector<8x32xf32>
    %cst_66 = arith.constant dense<0.000000e+00> : vector<8x128xf32>
    %151 = tpu.matmul %150, %11, %cst_66 {dimension_numbers = #tpu.dot_dimension_numbers<[1], [0], [0], [1], [0, 0, 1, 1], [], []>} : vector<8x32xf32>, vector<32x128xf32>, vector<8x128xf32> -> vector<8x128xf32>
    %152 = arith.addf %151, %14 : vector<8x128xf32>
    %153 = arith.index_cast %c1_i32 : i32 to index
    %c0_67 = arith.constant 0 : index
    %c0_68 = arith.constant 0 : index
    %154 = vector.load %arg10[%153, %c0_67, %c0_68] : memref<8x8x128xf32, #tpu.memory_space<vmem>>, vector<1x8x128xf32>
    %155 = vector.shape_cast %154 : vector<1x8x128xf32> to vector<8x128xf32>
    %156 = vector.shape_cast %152 : vector<8x128xf32> to vector<1x8x128xf32>
    tpu.vector_store %arg10[%153, %c0_67, %c0_68], %156 {strides = array<i32>} : memref<8x8x128xf32, #tpu.memory_space<vmem>>, vector<1x8x128xf32>,
    %cst_69 = arith.constant dense<0xFF800000> : vector<8xf32>
    %157 = vector.multi_reduction <maximumf>, %152, %cst_69 [1] : vector<8x128xf32> to vector<8xf32>
    %158 = vector.shape_cast %157 : vector<8xf32> to vector<8x1xf32>
    %159 = vector.broadcast %158 : vector<8x1xf32> to vector<8x128xf32>
    %160 = arith.cmpf oeq, %152, %159 : vector<8x128xf32>
    %c128_i32_70 = arith.constant 128 : i32
    %161 = vector.broadcast %c128_i32_70 : i32 to vector<8x128xi32>
    %162 = arith.select %160, %0, %161 : vector<8x128xi1>, vector<8x128xi32>
    %cst_71 = arith.constant dense<2147483647> : vector<8xi32>
    %163 = vector.multi_reduction <minsi>, %162, %cst_71 [1] : vector<8x128xi32> to vector<8xi32>
    %164 = vector.shape_cast %163 : vector<8xi32> to vector<8x1xi32>
    %165 = vector.broadcast %164 : vector<8x1xi32> to vector<8x128xi32>
    %166 = arith.cmpi eq, %0, %165 : vector<8x128xi32>
    %cst_72 = arith.constant 1.000000e+00 : f32
    %cst_73 = arith.constant 0.000000e+00 : f32
    %167 = vector.broadcast %cst_72 : f32 to vector<8x128xf32>
    %168 = vector.broadcast %cst_73 : f32 to vector<8x128xf32>
    %169 = arith.select %166, %167, %168 : vector<8x128xi1>, vector<8x128xf32>
    %c2_i32 = arith.constant 2 : i32
    %cst_74 = arith.constant dense<0.000000e+00> : vector<8x128xf32>
    %170 = tpu.matmul %169, %1, %cst_74 {dimension_numbers = #tpu.dot_dimension_numbers<[1], [0], [0], [1], [0, 0, 1, 1], [], []>} : vector<8x128xf32>, vector<128x128xf32>, vector<8x128xf32> -> vector<8x128xf32>
    %cst_75 = arith.constant dense<0.000000e+00> : vector<8x128xf32>
    %171 = tpu.matmul %124, %3, %cst_75 {dimension_numbers = #tpu.dot_dimension_numbers<[1], [0], [0], [1], [0, 0, 1, 1], [], []>} : vector<8x32xf32>, vector<32x128xf32>, vector<8x128xf32> -> vector<8x128xf32>
    %172 = arith.addf %170, %171 : vector<8x128xf32>
    %173 = arith.addf %172, %7 : vector<8x128xf32>
    %174 = math.tanh %173 : vector<8x128xf32>
    %175 = vector.extract_strided_slice %174 {offsets = [0, 0], sizes = [8, 32], strides = [1, 1]} : vector<8x128xf32> to vector<8x32xf32>
    %cst_76 = arith.constant 5.000000e-01 : f32
    %176 = vector.broadcast %cst_76 : f32 to vector<8x32xf32>
    %177 = arith.mulf %176, %175 : vector<8x32xf32>
    %cst_77 = arith.constant 5.000000e-01 : f32
    %178 = vector.broadcast %cst_77 : f32 to vector<8x32xf32>
    %179 = arith.addf %177, %178 : vector<8x32xf32>
    %180 = vector.extract_strided_slice %174 {offsets = [0, 32], sizes = [8, 32], strides = [1, 1]} : vector<8x128xf32> to vector<8x32xf32>
    %cst_78 = arith.constant 5.000000e-01 : f32
    %181 = vector.broadcast %cst_78 : f32 to vector<8x32xf32>
    %182 = arith.mulf %181, %180 : vector<8x32xf32>
    %cst_79 = arith.constant 5.000000e-01 : f32
    %183 = vector.broadcast %cst_79 : f32 to vector<8x32xf32>
    %184 = arith.addf %182, %183 : vector<8x32xf32>
    %185 = vector.extract_strided_slice %174 {offsets = [0, 64], sizes = [8, 32], strides = [1, 1]} : vector<8x128xf32> to vector<8x32xf32>
    %186 = vector.extract_strided_slice %174 {offsets = [0, 96], sizes = [8, 32], strides = [1, 1]} : vector<8x128xf32> to vector<8x32xf32>
    %cst_80 = arith.constant 5.000000e-01 : f32
    %187 = vector.broadcast %cst_80 : f32 to vector<8x32xf32>
    %188 = arith.mulf %187, %186 : vector<8x32xf32>
    %cst_81 = arith.constant 5.000000e-01 : f32
    %189 = vector.broadcast %cst_81 : f32 to vector<8x32xf32>
    %190 = arith.addf %188, %189 : vector<8x32xf32>
    %191 = arith.mulf %184, %122 : vector<8x32xf32>
    %192 = arith.mulf %179, %185 : vector<8x32xf32>
    %193 = arith.addf %191, %192 : vector<8x32xf32>
    %194 = math.tanh %193 : vector<8x32xf32>
    %195 = arith.mulf %190, %194 : vector<8x32xf32>
    %cst_82 = arith.constant dense<0.000000e+00> : vector<8x128xf32>
    %196 = tpu.matmul %195, %2, %cst_82 {dimension_numbers = #tpu.dot_dimension_numbers<[1], [0], [0], [1], [0, 0, 1, 1], [], []>} : vector<8x32xf32>, vector<32x128xf32>, vector<8x128xf32> -> vector<8x128xf32>
    %cst_83 = arith.constant dense<0.000000e+00> : vector<8x128xf32>
    %197 = tpu.matmul %150, %4, %cst_83 {dimension_numbers = #tpu.dot_dimension_numbers<[1], [0], [0], [1], [0, 0, 1, 1], [], []>} : vector<8x32xf32>, vector<32x128xf32>, vector<8x128xf32> -> vector<8x128xf32>
    %198 = arith.addf %196, %197 : vector<8x128xf32>
    %199 = arith.addf %198, %10 : vector<8x128xf32>
    %200 = math.tanh %199 : vector<8x128xf32>
    %201 = vector.extract_strided_slice %200 {offsets = [0, 0], sizes = [8, 32], strides = [1, 1]} : vector<8x128xf32> to vector<8x32xf32>
    %cst_84 = arith.constant 5.000000e-01 : f32
    %202 = vector.broadcast %cst_84 : f32 to vector<8x32xf32>
    %203 = arith.mulf %202, %201 : vector<8x32xf32>
    %cst_85 = arith.constant 5.000000e-01 : f32
    %204 = vector.broadcast %cst_85 : f32 to vector<8x32xf32>
    %205 = arith.addf %203, %204 : vector<8x32xf32>
    %206 = vector.extract_strided_slice %200 {offsets = [0, 32], sizes = [8, 32], strides = [1, 1]} : vector<8x128xf32> to vector<8x32xf32>
    %cst_86 = arith.constant 5.000000e-01 : f32
    %207 = vector.broadcast %cst_86 : f32 to vector<8x32xf32>
    %208 = arith.mulf %207, %206 : vector<8x32xf32>
    %cst_87 = arith.constant 5.000000e-01 : f32
    %209 = vector.broadcast %cst_87 : f32 to vector<8x32xf32>
    %210 = arith.addf %208, %209 : vector<8x32xf32>
    %211 = vector.extract_strided_slice %200 {offsets = [0, 64], sizes = [8, 32], strides = [1, 1]} : vector<8x128xf32> to vector<8x32xf32>
    %212 = vector.extract_strided_slice %200 {offsets = [0, 96], sizes = [8, 32], strides = [1, 1]} : vector<8x128xf32> to vector<8x32xf32>
    %cst_88 = arith.constant 5.000000e-01 : f32
    %213 = vector.broadcast %cst_88 : f32 to vector<8x32xf32>
    %214 = arith.mulf %213, %212 : vector<8x32xf32>
    %cst_89 = arith.constant 5.000000e-01 : f32
    %215 = vector.broadcast %cst_89 : f32 to vector<8x32xf32>
    %216 = arith.addf %214, %215 : vector<8x32xf32>
    %217 = arith.mulf %210, %148 : vector<8x32xf32>
    %218 = arith.mulf %205, %211 : vector<8x32xf32>
    %219 = arith.addf %217, %218 : vector<8x32xf32>
    %220 = math.tanh %219 : vector<8x32xf32>
    %221 = arith.mulf %216, %220 : vector<8x32xf32>
    %cst_90 = arith.constant dense<0.000000e+00> : vector<8x128xf32>
    %222 = tpu.matmul %221, %11, %cst_90 {dimension_numbers = #tpu.dot_dimension_numbers<[1], [0], [0], [1], [0, 0, 1, 1], [], []>} : vector<8x32xf32>, vector<32x128xf32>, vector<8x128xf32> -> vector<8x128xf32>
    %223 = arith.addf %222, %14 : vector<8x128xf32>
    %224 = arith.index_cast %c2_i32 : i32 to index
    %c0_91 = arith.constant 0 : index
    %c0_92 = arith.constant 0 : index
    %225 = vector.load %arg10[%224, %c0_91, %c0_92] : memref<8x8x128xf32, #tpu.memory_space<vmem>>, vector<1x8x128xf32>
    %226 = vector.shape_cast %225 : vector<1x8x128xf32> to vector<8x128xf32>
    %227 = vector.shape_cast %223 : vector<8x128xf32> to vector<1x8x128xf32>
    tpu.vector_store %arg10[%224, %c0_91, %c0_92], %227 {strides = array<i32>} : memref<8x8x128xf32, #tpu.memory_space<vmem>>, vector<1x8x128xf32>,
    %cst_93 = arith.constant dense<0xFF800000> : vector<8xf32>
    %228 = vector.multi_reduction <maximumf>, %223, %cst_93 [1] : vector<8x128xf32> to vector<8xf32>
    %229 = vector.shape_cast %228 : vector<8xf32> to vector<8x1xf32>
    %230 = vector.broadcast %229 : vector<8x1xf32> to vector<8x128xf32>
    %231 = arith.cmpf oeq, %223, %230 : vector<8x128xf32>
    %c128_i32_94 = arith.constant 128 : i32
    %232 = vector.broadcast %c128_i32_94 : i32 to vector<8x128xi32>
    %233 = arith.select %231, %0, %232 : vector<8x128xi1>, vector<8x128xi32>
    %cst_95 = arith.constant dense<2147483647> : vector<8xi32>
    %234 = vector.multi_reduction <minsi>, %233, %cst_95 [1] : vector<8x128xi32> to vector<8xi32>
    %235 = vector.shape_cast %234 : vector<8xi32> to vector<8x1xi32>
    %236 = vector.broadcast %235 : vector<8x1xi32> to vector<8x128xi32>
    %237 = arith.cmpi eq, %0, %236 : vector<8x128xi32>
    %cst_96 = arith.constant 1.000000e+00 : f32
    %cst_97 = arith.constant 0.000000e+00 : f32
    %238 = vector.broadcast %cst_96 : f32 to vector<8x128xf32>
    %239 = vector.broadcast %cst_97 : f32 to vector<8x128xf32>
    %240 = arith.select %237, %238, %239 : vector<8x128xi1>, vector<8x128xf32>
    %c3_i32_98 = arith.constant 3 : i32
    %cst_99 = arith.constant dense<0.000000e+00> : vector<8x128xf32>
    %241 = tpu.matmul %240, %1, %cst_99 {dimension_numbers = #tpu.dot_dimension_numbers<[1], [0], [0], [1], [0, 0, 1, 1], [], []>} : vector<8x128xf32>, vector<128x128xf32>, vector<8x128xf32> -> vector<8x128xf32>
    %cst_100 = arith.constant dense<0.000000e+00> : vector<8x128xf32>
    %242 = tpu.matmul %195, %3, %cst_100 {dimension_numbers = #tpu.dot_dimension_numbers<[1], [0], [0], [1], [0, 0, 1, 1], [], []>} : vector<8x32xf32>, vector<32x128xf32>, vector<8x128xf32> -> vector<8x128xf32>
    %243 = arith.addf %241, %242 : vector<8x128xf32>
    %244 = arith.addf %243, %7 : vector<8x128xf32>
    %245 = math.tanh %244 : vector<8x128xf32>
    %246 = vector.extract_strided_slice %245 {offsets = [0, 0], sizes = [8, 32], strides = [1, 1]} : vector<8x128xf32> to vector<8x32xf32>
    %cst_101 = arith.constant 5.000000e-01 : f32
    %247 = vector.broadcast %cst_101 : f32 to vector<8x32xf32>
    %248 = arith.mulf %247, %246 : vector<8x32xf32>
    %cst_102 = arith.constant 5.000000e-01 : f32
    %249 = vector.broadcast %cst_102 : f32 to vector<8x32xf32>
    %250 = arith.addf %248, %249 : vector<8x32xf32>
    %251 = vector.extract_strided_slice %245 {offsets = [0, 32], sizes = [8, 32], strides = [1, 1]} : vector<8x128xf32> to vector<8x32xf32>
    %cst_103 = arith.constant 5.000000e-01 : f32
    %252 = vector.broadcast %cst_103 : f32 to vector<8x32xf32>
    %253 = arith.mulf %252, %251 : vector<8x32xf32>
    %cst_104 = arith.constant 5.000000e-01 : f32
    %254 = vector.broadcast %cst_104 : f32 to vector<8x32xf32>
    %255 = arith.addf %253, %254 : vector<8x32xf32>
    %256 = vector.extract_strided_slice %245 {offsets = [0, 64], sizes = [8, 32], strides = [1, 1]} : vector<8x128xf32> to vector<8x32xf32>
    %257 = vector.extract_strided_slice %245 {offsets = [0, 96], sizes = [8, 32], strides = [1, 1]} : vector<8x128xf32> to vector<8x32xf32>
    %cst_105 = arith.constant 5.000000e-01 : f32
    %258 = vector.broadcast %cst_105 : f32 to vector<8x32xf32>
    %259 = arith.mulf %258, %257 : vector<8x32xf32>
    %cst_106 = arith.constant 5.000000e-01 : f32
    %260 = vector.broadcast %cst_106 : f32 to vector<8x32xf32>
    %261 = arith.addf %259, %260 : vector<8x32xf32>
    %262 = arith.mulf %255, %193 : vector<8x32xf32>
    %263 = arith.mulf %250, %256 : vector<8x32xf32>
    %264 = arith.addf %262, %263 : vector<8x32xf32>
    %265 = math.tanh %264 : vector<8x32xf32>
    %266 = arith.mulf %261, %265 : vector<8x32xf32>
    %cst_107 = arith.constant dense<0.000000e+00> : vector<8x128xf32>
    %267 = tpu.matmul %266, %2, %cst_107 {dimension_numbers = #tpu.dot_dimension_numbers<[1], [0], [0], [1], [0, 0, 1, 1], [], []>} : vector<8x32xf32>, vector<32x128xf32>, vector<8x128xf32> -> vector<8x128xf32>
    %cst_108 = arith.constant dense<0.000000e+00> : vector<8x128xf32>
    %268 = tpu.matmul %221, %4, %cst_108 {dimension_numbers = #tpu.dot_dimension_numbers<[1], [0], [0], [1], [0, 0, 1, 1], [], []>} : vector<8x32xf32>, vector<32x128xf32>, vector<8x128xf32> -> vector<8x128xf32>
    %269 = arith.addf %267, %268 : vector<8x128xf32>
    %270 = arith.addf %269, %10 : vector<8x128xf32>
    %271 = math.tanh %270 : vector<8x128xf32>
    %272 = vector.extract_strided_slice %271 {offsets = [0, 0], sizes = [8, 32], strides = [1, 1]} : vector<8x128xf32> to vector<8x32xf32>
    %cst_109 = arith.constant 5.000000e-01 : f32
    %273 = vector.broadcast %cst_109 : f32 to vector<8x32xf32>
    %274 = arith.mulf %273, %272 : vector<8x32xf32>
    %cst_110 = arith.constant 5.000000e-01 : f32
    %275 = vector.broadcast %cst_110 : f32 to vector<8x32xf32>
    %276 = arith.addf %274, %275 : vector<8x32xf32>
    %277 = vector.extract_strided_slice %271 {offsets = [0, 32], sizes = [8, 32], strides = [1, 1]} : vector<8x128xf32> to vector<8x32xf32>
    %cst_111 = arith.constant 5.000000e-01 : f32
    %278 = vector.broadcast %cst_111 : f32 to vector<8x32xf32>
    %279 = arith.mulf %278, %277 : vector<8x32xf32>
    %cst_112 = arith.constant 5.000000e-01 : f32
    %280 = vector.broadcast %cst_112 : f32 to vector<8x32xf32>
    %281 = arith.addf %279, %280 : vector<8x32xf32>
    %282 = vector.extract_strided_slice %271 {offsets = [0, 64], sizes = [8, 32], strides = [1, 1]} : vector<8x128xf32> to vector<8x32xf32>
    %283 = vector.extract_strided_slice %271 {offsets = [0, 96], sizes = [8, 32], strides = [1, 1]} : vector<8x128xf32> to vector<8x32xf32>
    %cst_113 = arith.constant 5.000000e-01 : f32
    %284 = vector.broadcast %cst_113 : f32 to vector<8x32xf32>
    %285 = arith.mulf %284, %283 : vector<8x32xf32>
    %cst_114 = arith.constant 5.000000e-01 : f32
    %286 = vector.broadcast %cst_114 : f32 to vector<8x32xf32>
    %287 = arith.addf %285, %286 : vector<8x32xf32>
    %288 = arith.mulf %281, %219 : vector<8x32xf32>
    %289 = arith.mulf %276, %282 : vector<8x32xf32>
    %290 = arith.addf %288, %289 : vector<8x32xf32>
    %291 = math.tanh %290 : vector<8x32xf32>
    %292 = arith.mulf %287, %291 : vector<8x32xf32>
    %cst_115 = arith.constant dense<0.000000e+00> : vector<8x128xf32>
    %293 = tpu.matmul %292, %11, %cst_115 {dimension_numbers = #tpu.dot_dimension_numbers<[1], [0], [0], [1], [0, 0, 1, 1], [], []>} : vector<8x32xf32>, vector<32x128xf32>, vector<8x128xf32> -> vector<8x128xf32>
    %294 = arith.addf %293, %14 : vector<8x128xf32>
    %295 = arith.index_cast %c3_i32_98 : i32 to index
    %c0_116 = arith.constant 0 : index
    %c0_117 = arith.constant 0 : index
    %296 = vector.load %arg10[%295, %c0_116, %c0_117] : memref<8x8x128xf32, #tpu.memory_space<vmem>>, vector<1x8x128xf32>
    %297 = vector.shape_cast %296 : vector<1x8x128xf32> to vector<8x128xf32>
    %298 = vector.shape_cast %294 : vector<8x128xf32> to vector<1x8x128xf32>
    tpu.vector_store %arg10[%295, %c0_116, %c0_117], %298 {strides = array<i32>} : memref<8x8x128xf32, #tpu.memory_space<vmem>>, vector<1x8x128xf32>,
    %cst_118 = arith.constant dense<0xFF800000> : vector<8xf32>
    %299 = vector.multi_reduction <maximumf>, %294, %cst_118 [1] : vector<8x128xf32> to vector<8xf32>
    %300 = vector.shape_cast %299 : vector<8xf32> to vector<8x1xf32>
    %301 = vector.broadcast %300 : vector<8x1xf32> to vector<8x128xf32>
    %302 = arith.cmpf oeq, %294, %301 : vector<8x128xf32>
    %c128_i32_119 = arith.constant 128 : i32
    %303 = vector.broadcast %c128_i32_119 : i32 to vector<8x128xi32>
    %304 = arith.select %302, %0, %303 : vector<8x128xi1>, vector<8x128xi32>
    %cst_120 = arith.constant dense<2147483647> : vector<8xi32>
    %305 = vector.multi_reduction <minsi>, %304, %cst_120 [1] : vector<8x128xi32> to vector<8xi32>
    %306 = vector.shape_cast %305 : vector<8xi32> to vector<8x1xi32>
    %307 = vector.broadcast %306 : vector<8x1xi32> to vector<8x128xi32>
    %308 = arith.cmpi eq, %0, %307 : vector<8x128xi32>
    %cst_121 = arith.constant 1.000000e+00 : f32
    %cst_122 = arith.constant 0.000000e+00 : f32
    %309 = vector.broadcast %cst_121 : f32 to vector<8x128xf32>
    %310 = vector.broadcast %cst_122 : f32 to vector<8x128xf32>
    %311 = arith.select %308, %309, %310 : vector<8x128xi1>, vector<8x128xf32>
    %c4_i32 = arith.constant 4 : i32
    %cst_123 = arith.constant dense<0.000000e+00> : vector<8x128xf32>
    %312 = tpu.matmul %311, %1, %cst_123 {dimension_numbers = #tpu.dot_dimension_numbers<[1], [0], [0], [1], [0, 0, 1, 1], [], []>} : vector<8x128xf32>, vector<128x128xf32>, vector<8x128xf32> -> vector<8x128xf32>
    %cst_124 = arith.constant dense<0.000000e+00> : vector<8x128xf32>
    %313 = tpu.matmul %266, %3, %cst_124 {dimension_numbers = #tpu.dot_dimension_numbers<[1], [0], [0], [1], [0, 0, 1, 1], [], []>} : vector<8x32xf32>, vector<32x128xf32>, vector<8x128xf32> -> vector<8x128xf32>
    %314 = arith.addf %312, %313 : vector<8x128xf32>
    %315 = arith.addf %314, %7 : vector<8x128xf32>
    %316 = math.tanh %315 : vector<8x128xf32>
    %317 = vector.extract_strided_slice %316 {offsets = [0, 0], sizes = [8, 32], strides = [1, 1]} : vector<8x128xf32> to vector<8x32xf32>
    %cst_125 = arith.constant 5.000000e-01 : f32
    %318 = vector.broadcast %cst_125 : f32 to vector<8x32xf32>
    %319 = arith.mulf %318, %317 : vector<8x32xf32>
    %cst_126 = arith.constant 5.000000e-01 : f32
    %320 = vector.broadcast %cst_126 : f32 to vector<8x32xf32>
    %321 = arith.addf %319, %320 : vector<8x32xf32>
    %322 = vector.extract_strided_slice %316 {offsets = [0, 32], sizes = [8, 32], strides = [1, 1]} : vector<8x128xf32> to vector<8x32xf32>
    %cst_127 = arith.constant 5.000000e-01 : f32
    %323 = vector.broadcast %cst_127 : f32 to vector<8x32xf32>
    %324 = arith.mulf %323, %322 : vector<8x32xf32>
    %cst_128 = arith.constant 5.000000e-01 : f32
    %325 = vector.broadcast %cst_128 : f32 to vector<8x32xf32>
    %326 = arith.addf %324, %325 : vector<8x32xf32>
    %327 = vector.extract_strided_slice %316 {offsets = [0, 64], sizes = [8, 32], strides = [1, 1]} : vector<8x128xf32> to vector<8x32xf32>
    %328 = vector.extract_strided_slice %316 {offsets = [0, 96], sizes = [8, 32], strides = [1, 1]} : vector<8x128xf32> to vector<8x32xf32>
    %cst_129 = arith.constant 5.000000e-01 : f32
    %329 = vector.broadcast %cst_129 : f32 to vector<8x32xf32>
    %330 = arith.mulf %329, %328 : vector<8x32xf32>
    %cst_130 = arith.constant 5.000000e-01 : f32
    %331 = vector.broadcast %cst_130 : f32 to vector<8x32xf32>
    %332 = arith.addf %330, %331 : vector<8x32xf32>
    %333 = arith.mulf %326, %264 : vector<8x32xf32>
    %334 = arith.mulf %321, %327 : vector<8x32xf32>
    %335 = arith.addf %333, %334 : vector<8x32xf32>
    %336 = math.tanh %335 : vector<8x32xf32>
    %337 = arith.mulf %332, %336 : vector<8x32xf32>
    %cst_131 = arith.constant dense<0.000000e+00> : vector<8x128xf32>
    %338 = tpu.matmul %337, %2, %cst_131 {dimension_numbers = #tpu.dot_dimension_numbers<[1], [0], [0], [1], [0, 0, 1, 1], [], []>} : vector<8x32xf32>, vector<32x128xf32>, vector<8x128xf32> -> vector<8x128xf32>
    %cst_132 = arith.constant dense<0.000000e+00> : vector<8x128xf32>
    %339 = tpu.matmul %292, %4, %cst_132 {dimension_numbers = #tpu.dot_dimension_numbers<[1], [0], [0], [1], [0, 0, 1, 1], [], []>} : vector<8x32xf32>, vector<32x128xf32>, vector<8x128xf32> -> vector<8x128xf32>
    %340 = arith.addf %338, %339 : vector<8x128xf32>
    %341 = arith.addf %340, %10 : vector<8x128xf32>
    %342 = math.tanh %341 : vector<8x128xf32>
    %343 = vector.extract_strided_slice %342 {offsets = [0, 0], sizes = [8, 32], strides = [1, 1]} : vector<8x128xf32> to vector<8x32xf32>
    %cst_133 = arith.constant 5.000000e-01 : f32
    %344 = vector.broadcast %cst_133 : f32 to vector<8x32xf32>
    %345 = arith.mulf %344, %343 : vector<8x32xf32>
    %cst_134 = arith.constant 5.000000e-01 : f32
    %346 = vector.broadcast %cst_134 : f32 to vector<8x32xf32>
    %347 = arith.addf %345, %346 : vector<8x32xf32>
    %348 = vector.extract_strided_slice %342 {offsets = [0, 32], sizes = [8, 32], strides = [1, 1]} : vector<8x128xf32> to vector<8x32xf32>
    %cst_135 = arith.constant 5.000000e-01 : f32
    %349 = vector.broadcast %cst_135 : f32 to vector<8x32xf32>
    %350 = arith.mulf %349, %348 : vector<8x32xf32>
    %cst_136 = arith.constant 5.000000e-01 : f32
    %351 = vector.broadcast %cst_136 : f32 to vector<8x32xf32>
    %352 = arith.addf %350, %351 : vector<8x32xf32>
    %353 = vector.extract_strided_slice %342 {offsets = [0, 64], sizes = [8, 32], strides = [1, 1]} : vector<8x128xf32> to vector<8x32xf32>
    %354 = vector.extract_strided_slice %342 {offsets = [0, 96], sizes = [8, 32], strides = [1, 1]} : vector<8x128xf32> to vector<8x32xf32>
    %cst_137 = arith.constant 5.000000e-01 : f32
    %355 = vector.broadcast %cst_137 : f32 to vector<8x32xf32>
    %356 = arith.mulf %355, %354 : vector<8x32xf32>
    %cst_138 = arith.constant 5.000000e-01 : f32
    %357 = vector.broadcast %cst_138 : f32 to vector<8x32xf32>
    %358 = arith.addf %356, %357 : vector<8x32xf32>
    %359 = arith.mulf %352, %290 : vector<8x32xf32>
    %360 = arith.mulf %347, %353 : vector<8x32xf32>
    %361 = arith.addf %359, %360 : vector<8x32xf32>
    %362 = math.tanh %361 : vector<8x32xf32>
    %363 = arith.mulf %358, %362 : vector<8x32xf32>
    %cst_139 = arith.constant dense<0.000000e+00> : vector<8x128xf32>
    %364 = tpu.matmul %363, %11, %cst_139 {dimension_numbers = #tpu.dot_dimension_numbers<[1], [0], [0], [1], [0, 0, 1, 1], [], []>} : vector<8x32xf32>, vector<32x128xf32>, vector<8x128xf32> -> vector<8x128xf32>
    %365 = arith.addf %364, %14 : vector<8x128xf32>
    %366 = arith.index_cast %c4_i32 : i32 to index
    %c0_140 = arith.constant 0 : index
    %c0_141 = arith.constant 0 : index
    %367 = vector.load %arg10[%366, %c0_140, %c0_141] : memref<8x8x128xf32, #tpu.memory_space<vmem>>, vector<1x8x128xf32>
    %368 = vector.shape_cast %367 : vector<1x8x128xf32> to vector<8x128xf32>
    %369 = vector.shape_cast %365 : vector<8x128xf32> to vector<1x8x128xf32>
    tpu.vector_store %arg10[%366, %c0_140, %c0_141], %369 {strides = array<i32>} : memref<8x8x128xf32, #tpu.memory_space<vmem>>, vector<1x8x128xf32>,
    %cst_142 = arith.constant dense<0xFF800000> : vector<8xf32>
    %370 = vector.multi_reduction <maximumf>, %365, %cst_142 [1] : vector<8x128xf32> to vector<8xf32>
    %371 = vector.shape_cast %370 : vector<8xf32> to vector<8x1xf32>
    %372 = vector.broadcast %371 : vector<8x1xf32> to vector<8x128xf32>
    %373 = arith.cmpf oeq, %365, %372 : vector<8x128xf32>
    %c128_i32_143 = arith.constant 128 : i32
    %374 = vector.broadcast %c128_i32_143 : i32 to vector<8x128xi32>
    %375 = arith.select %373, %0, %374 : vector<8x128xi1>, vector<8x128xi32>
    %cst_144 = arith.constant dense<2147483647> : vector<8xi32>
    %376 = vector.multi_reduction <minsi>, %375, %cst_144 [1] : vector<8x128xi32> to vector<8xi32>
    %377 = vector.shape_cast %376 : vector<8xi32> to vector<8x1xi32>
    %378 = vector.broadcast %377 : vector<8x1xi32> to vector<8x128xi32>
    %379 = arith.cmpi eq, %0, %378 : vector<8x128xi32>
    %cst_145 = arith.constant 1.000000e+00 : f32
    %cst_146 = arith.constant 0.000000e+00 : f32
    %380 = vector.broadcast %cst_145 : f32 to vector<8x128xf32>
    %381 = vector.broadcast %cst_146 : f32 to vector<8x128xf32>
    %382 = arith.select %379, %380, %381 : vector<8x128xi1>, vector<8x128xf32>
    %c5_i32 = arith.constant 5 : i32
    %cst_147 = arith.constant dense<0.000000e+00> : vector<8x128xf32>
    %383 = tpu.matmul %382, %1, %cst_147 {dimension_numbers = #tpu.dot_dimension_numbers<[1], [0], [0], [1], [0, 0, 1, 1], [], []>} : vector<8x128xf32>, vector<128x128xf32>, vector<8x128xf32> -> vector<8x128xf32>
    %cst_148 = arith.constant dense<0.000000e+00> : vector<8x128xf32>
    %384 = tpu.matmul %337, %3, %cst_148 {dimension_numbers = #tpu.dot_dimension_numbers<[1], [0], [0], [1], [0, 0, 1, 1], [], []>} : vector<8x32xf32>, vector<32x128xf32>, vector<8x128xf32> -> vector<8x128xf32>
    %385 = arith.addf %383, %384 : vector<8x128xf32>
    %386 = arith.addf %385, %7 : vector<8x128xf32>
    %387 = math.tanh %386 : vector<8x128xf32>
    %388 = vector.extract_strided_slice %387 {offsets = [0, 0], sizes = [8, 32], strides = [1, 1]} : vector<8x128xf32> to vector<8x32xf32>
    %cst_149 = arith.constant 5.000000e-01 : f32
    %389 = vector.broadcast %cst_149 : f32 to vector<8x32xf32>
    %390 = arith.mulf %389, %388 : vector<8x32xf32>
    %cst_150 = arith.constant 5.000000e-01 : f32
    %391 = vector.broadcast %cst_150 : f32 to vector<8x32xf32>
    %392 = arith.addf %390, %391 : vector<8x32xf32>
    %393 = vector.extract_strided_slice %387 {offsets = [0, 32], sizes = [8, 32], strides = [1, 1]} : vector<8x128xf32> to vector<8x32xf32>
    %cst_151 = arith.constant 5.000000e-01 : f32
    %394 = vector.broadcast %cst_151 : f32 to vector<8x32xf32>
    %395 = arith.mulf %394, %393 : vector<8x32xf32>
    %cst_152 = arith.constant 5.000000e-01 : f32
    %396 = vector.broadcast %cst_152 : f32 to vector<8x32xf32>
    %397 = arith.addf %395, %396 : vector<8x32xf32>
    %398 = vector.extract_strided_slice %387 {offsets = [0, 64], sizes = [8, 32], strides = [1, 1]} : vector<8x128xf32> to vector<8x32xf32>
    %399 = vector.extract_strided_slice %387 {offsets = [0, 96], sizes = [8, 32], strides = [1, 1]} : vector<8x128xf32> to vector<8x32xf32>
    %cst_153 = arith.constant 5.000000e-01 : f32
    %400 = vector.broadcast %cst_153 : f32 to vector<8x32xf32>
    %401 = arith.mulf %400, %399 : vector<8x32xf32>
    %cst_154 = arith.constant 5.000000e-01 : f32
    %402 = vector.broadcast %cst_154 : f32 to vector<8x32xf32>
    %403 = arith.addf %401, %402 : vector<8x32xf32>
    %404 = arith.mulf %397, %335 : vector<8x32xf32>
    %405 = arith.mulf %392, %398 : vector<8x32xf32>
    %406 = arith.addf %404, %405 : vector<8x32xf32>
    %407 = math.tanh %406 : vector<8x32xf32>
    %408 = arith.mulf %403, %407 : vector<8x32xf32>
    %cst_155 = arith.constant dense<0.000000e+00> : vector<8x128xf32>
    %409 = tpu.matmul %408, %2, %cst_155 {dimension_numbers = #tpu.dot_dimension_numbers<[1], [0], [0], [1], [0, 0, 1, 1], [], []>} : vector<8x32xf32>, vector<32x128xf32>, vector<8x128xf32> -> vector<8x128xf32>
    %cst_156 = arith.constant dense<0.000000e+00> : vector<8x128xf32>
    %410 = tpu.matmul %363, %4, %cst_156 {dimension_numbers = #tpu.dot_dimension_numbers<[1], [0], [0], [1], [0, 0, 1, 1], [], []>} : vector<8x32xf32>, vector<32x128xf32>, vector<8x128xf32> -> vector<8x128xf32>
    %411 = arith.addf %409, %410 : vector<8x128xf32>
    %412 = arith.addf %411, %10 : vector<8x128xf32>
    %413 = math.tanh %412 : vector<8x128xf32>
    %414 = vector.extract_strided_slice %413 {offsets = [0, 0], sizes = [8, 32], strides = [1, 1]} : vector<8x128xf32> to vector<8x32xf32>
    %cst_157 = arith.constant 5.000000e-01 : f32
    %415 = vector.broadcast %cst_157 : f32 to vector<8x32xf32>
    %416 = arith.mulf %415, %414 : vector<8x32xf32>
    %cst_158 = arith.constant 5.000000e-01 : f32
    %417 = vector.broadcast %cst_158 : f32 to vector<8x32xf32>
    %418 = arith.addf %416, %417 : vector<8x32xf32>
    %419 = vector.extract_strided_slice %413 {offsets = [0, 32], sizes = [8, 32], strides = [1, 1]} : vector<8x128xf32> to vector<8x32xf32>
    %cst_159 = arith.constant 5.000000e-01 : f32
    %420 = vector.broadcast %cst_159 : f32 to vector<8x32xf32>
    %421 = arith.mulf %420, %419 : vector<8x32xf32>
    %cst_160 = arith.constant 5.000000e-01 : f32
    %422 = vector.broadcast %cst_160 : f32 to vector<8x32xf32>
    %423 = arith.addf %421, %422 : vector<8x32xf32>
    %424 = vector.extract_strided_slice %413 {offsets = [0, 64], sizes = [8, 32], strides = [1, 1]} : vector<8x128xf32> to vector<8x32xf32>
    %425 = vector.extract_strided_slice %413 {offsets = [0, 96], sizes = [8, 32], strides = [1, 1]} : vector<8x128xf32> to vector<8x32xf32>
    %cst_161 = arith.constant 5.000000e-01 : f32
    %426 = vector.broadcast %cst_161 : f32 to vector<8x32xf32>
    %427 = arith.mulf %426, %425 : vector<8x32xf32>
    %cst_162 = arith.constant 5.000000e-01 : f32
    %428 = vector.broadcast %cst_162 : f32 to vector<8x32xf32>
    %429 = arith.addf %427, %428 : vector<8x32xf32>
    %430 = arith.mulf %423, %361 : vector<8x32xf32>
    %431 = arith.mulf %418, %424 : vector<8x32xf32>
    %432 = arith.addf %430, %431 : vector<8x32xf32>
    %433 = math.tanh %432 : vector<8x32xf32>
    %434 = arith.mulf %429, %433 : vector<8x32xf32>
    %cst_163 = arith.constant dense<0.000000e+00> : vector<8x128xf32>
    %435 = tpu.matmul %434, %11, %cst_163 {dimension_numbers = #tpu.dot_dimension_numbers<[1], [0], [0], [1], [0, 0, 1, 1], [], []>} : vector<8x32xf32>, vector<32x128xf32>, vector<8x128xf32> -> vector<8x128xf32>
    %436 = arith.addf %435, %14 : vector<8x128xf32>
    %437 = arith.index_cast %c5_i32 : i32 to index
    %c0_164 = arith.constant 0 : index
    %c0_165 = arith.constant 0 : index
    %438 = vector.load %arg10[%437, %c0_164, %c0_165] : memref<8x8x128xf32, #tpu.memory_space<vmem>>, vector<1x8x128xf32>
    %439 = vector.shape_cast %438 : vector<1x8x128xf32> to vector<8x128xf32>
    %440 = vector.shape_cast %436 : vector<8x128xf32> to vector<1x8x128xf32>
    tpu.vector_store %arg10[%437, %c0_164, %c0_165], %440 {strides = array<i32>} : memref<8x8x128xf32, #tpu.memory_space<vmem>>, vector<1x8x128xf32>,
    %cst_166 = arith.constant dense<0xFF800000> : vector<8xf32>
    %441 = vector.multi_reduction <maximumf>, %436, %cst_166 [1] : vector<8x128xf32> to vector<8xf32>
    %442 = vector.shape_cast %441 : vector<8xf32> to vector<8x1xf32>
    %443 = vector.broadcast %442 : vector<8x1xf32> to vector<8x128xf32>
    %444 = arith.cmpf oeq, %436, %443 : vector<8x128xf32>
    %c128_i32_167 = arith.constant 128 : i32
    %445 = vector.broadcast %c128_i32_167 : i32 to vector<8x128xi32>
    %446 = arith.select %444, %0, %445 : vector<8x128xi1>, vector<8x128xi32>
    %cst_168 = arith.constant dense<2147483647> : vector<8xi32>
    %447 = vector.multi_reduction <minsi>, %446, %cst_168 [1] : vector<8x128xi32> to vector<8xi32>
    %448 = vector.shape_cast %447 : vector<8xi32> to vector<8x1xi32>
    %449 = vector.broadcast %448 : vector<8x1xi32> to vector<8x128xi32>
    %450 = arith.cmpi eq, %0, %449 : vector<8x128xi32>
    %cst_169 = arith.constant 1.000000e+00 : f32
    %cst_170 = arith.constant 0.000000e+00 : f32
    %451 = vector.broadcast %cst_169 : f32 to vector<8x128xf32>
    %452 = vector.broadcast %cst_170 : f32 to vector<8x128xf32>
    %453 = arith.select %450, %451, %452 : vector<8x128xi1>, vector<8x128xf32>
    %c6_i32 = arith.constant 6 : i32
    %cst_171 = arith.constant dense<0.000000e+00> : vector<8x128xf32>
    %454 = tpu.matmul %453, %1, %cst_171 {dimension_numbers = #tpu.dot_dimension_numbers<[1], [0], [0], [1], [0, 0, 1, 1], [], []>} : vector<8x128xf32>, vector<128x128xf32>, vector<8x128xf32> -> vector<8x128xf32>
    %cst_172 = arith.constant dense<0.000000e+00> : vector<8x128xf32>
    %455 = tpu.matmul %408, %3, %cst_172 {dimension_numbers = #tpu.dot_dimension_numbers<[1], [0], [0], [1], [0, 0, 1, 1], [], []>} : vector<8x32xf32>, vector<32x128xf32>, vector<8x128xf32> -> vector<8x128xf32>
    %456 = arith.addf %454, %455 : vector<8x128xf32>
    %457 = arith.addf %456, %7 : vector<8x128xf32>
    %458 = math.tanh %457 : vector<8x128xf32>
    %459 = vector.extract_strided_slice %458 {offsets = [0, 0], sizes = [8, 32], strides = [1, 1]} : vector<8x128xf32> to vector<8x32xf32>
    %cst_173 = arith.constant 5.000000e-01 : f32
    %460 = vector.broadcast %cst_173 : f32 to vector<8x32xf32>
    %461 = arith.mulf %460, %459 : vector<8x32xf32>
    %cst_174 = arith.constant 5.000000e-01 : f32
    %462 = vector.broadcast %cst_174 : f32 to vector<8x32xf32>
    %463 = arith.addf %461, %462 : vector<8x32xf32>
    %464 = vector.extract_strided_slice %458 {offsets = [0, 32], sizes = [8, 32], strides = [1, 1]} : vector<8x128xf32> to vector<8x32xf32>
    %cst_175 = arith.constant 5.000000e-01 : f32
    %465 = vector.broadcast %cst_175 : f32 to vector<8x32xf32>
    %466 = arith.mulf %465, %464 : vector<8x32xf32>
    %cst_176 = arith.constant 5.000000e-01 : f32
    %467 = vector.broadcast %cst_176 : f32 to vector<8x32xf32>
    %468 = arith.addf %466, %467 : vector<8x32xf32>
    %469 = vector.extract_strided_slice %458 {offsets = [0, 64], sizes = [8, 32], strides = [1, 1]} : vector<8x128xf32> to vector<8x32xf32>
    %470 = vector.extract_strided_slice %458 {offsets = [0, 96], sizes = [8, 32], strides = [1, 1]} : vector<8x128xf32> to vector<8x32xf32>
    %cst_177 = arith.constant 5.000000e-01 : f32
    %471 = vector.broadcast %cst_177 : f32 to vector<8x32xf32>
    %472 = arith.mulf %471, %470 : vector<8x32xf32>
    %cst_178 = arith.constant 5.000000e-01 : f32
    %473 = vector.broadcast %cst_178 : f32 to vector<8x32xf32>
    %474 = arith.addf %472, %473 : vector<8x32xf32>
    %475 = arith.mulf %468, %406 : vector<8x32xf32>
    %476 = arith.mulf %463, %469 : vector<8x32xf32>
    %477 = arith.addf %475, %476 : vector<8x32xf32>
    %478 = math.tanh %477 : vector<8x32xf32>
    %479 = arith.mulf %474, %478 : vector<8x32xf32>
    %cst_179 = arith.constant dense<0.000000e+00> : vector<8x128xf32>
    %480 = tpu.matmul %479, %2, %cst_179 {dimension_numbers = #tpu.dot_dimension_numbers<[1], [0], [0], [1], [0, 0, 1, 1], [], []>} : vector<8x32xf32>, vector<32x128xf32>, vector<8x128xf32> -> vector<8x128xf32>
    %cst_180 = arith.constant dense<0.000000e+00> : vector<8x128xf32>
    %481 = tpu.matmul %434, %4, %cst_180 {dimension_numbers = #tpu.dot_dimension_numbers<[1], [0], [0], [1], [0, 0, 1, 1], [], []>} : vector<8x32xf32>, vector<32x128xf32>, vector<8x128xf32> -> vector<8x128xf32>
    %482 = arith.addf %480, %481 : vector<8x128xf32>
    %483 = arith.addf %482, %10 : vector<8x128xf32>
    %484 = math.tanh %483 : vector<8x128xf32>
    %485 = vector.extract_strided_slice %484 {offsets = [0, 0], sizes = [8, 32], strides = [1, 1]} : vector<8x128xf32> to vector<8x32xf32>
    %cst_181 = arith.constant 5.000000e-01 : f32
    %486 = vector.broadcast %cst_181 : f32 to vector<8x32xf32>
    %487 = arith.mulf %486, %485 : vector<8x32xf32>
    %cst_182 = arith.constant 5.000000e-01 : f32
    %488 = vector.broadcast %cst_182 : f32 to vector<8x32xf32>
    %489 = arith.addf %487, %488 : vector<8x32xf32>
    %490 = vector.extract_strided_slice %484 {offsets = [0, 32], sizes = [8, 32], strides = [1, 1]} : vector<8x128xf32> to vector<8x32xf32>
    %cst_183 = arith.constant 5.000000e-01 : f32
    %491 = vector.broadcast %cst_183 : f32 to vector<8x32xf32>
    %492 = arith.mulf %491, %490 : vector<8x32xf32>
    %cst_184 = arith.constant 5.000000e-01 : f32
    %493 = vector.broadcast %cst_184 : f32 to vector<8x32xf32>
    %494 = arith.addf %492, %493 : vector<8x32xf32>
    %495 = vector.extract_strided_slice %484 {offsets = [0, 64], sizes = [8, 32], strides = [1, 1]} : vector<8x128xf32> to vector<8x32xf32>
    %496 = vector.extract_strided_slice %484 {offsets = [0, 96], sizes = [8, 32], strides = [1, 1]} : vector<8x128xf32> to vector<8x32xf32>
    %cst_185 = arith.constant 5.000000e-01 : f32
    %497 = vector.broadcast %cst_185 : f32 to vector<8x32xf32>
    %498 = arith.mulf %497, %496 : vector<8x32xf32>
    %cst_186 = arith.constant 5.000000e-01 : f32
    %499 = vector.broadcast %cst_186 : f32 to vector<8x32xf32>
    %500 = arith.addf %498, %499 : vector<8x32xf32>
    %501 = arith.mulf %494, %432 : vector<8x32xf32>
    %502 = arith.mulf %489, %495 : vector<8x32xf32>
    %503 = arith.addf %501, %502 : vector<8x32xf32>
    %504 = math.tanh %503 : vector<8x32xf32>
    %505 = arith.mulf %500, %504 : vector<8x32xf32>
    %cst_187 = arith.constant dense<0.000000e+00> : vector<8x128xf32>
    %506 = tpu.matmul %505, %11, %cst_187 {dimension_numbers = #tpu.dot_dimension_numbers<[1], [0], [0], [1], [0, 0, 1, 1], [], []>} : vector<8x32xf32>, vector<32x128xf32>, vector<8x128xf32> -> vector<8x128xf32>
    %507 = arith.addf %506, %14 : vector<8x128xf32>
    %508 = arith.index_cast %c6_i32 : i32 to index
    %c0_188 = arith.constant 0 : index
    %c0_189 = arith.constant 0 : index
    %509 = vector.load %arg10[%508, %c0_188, %c0_189] : memref<8x8x128xf32, #tpu.memory_space<vmem>>, vector<1x8x128xf32>
    %510 = vector.shape_cast %509 : vector<1x8x128xf32> to vector<8x128xf32>
    %511 = vector.shape_cast %507 : vector<8x128xf32> to vector<1x8x128xf32>
    tpu.vector_store %arg10[%508, %c0_188, %c0_189], %511 {strides = array<i32>} : memref<8x8x128xf32, #tpu.memory_space<vmem>>, vector<1x8x128xf32>,
    %cst_190 = arith.constant dense<0xFF800000> : vector<8xf32>
    %512 = vector.multi_reduction <maximumf>, %507, %cst_190 [1] : vector<8x128xf32> to vector<8xf32>
    %513 = vector.shape_cast %512 : vector<8xf32> to vector<8x1xf32>
    %514 = vector.broadcast %513 : vector<8x1xf32> to vector<8x128xf32>
    %515 = arith.cmpf oeq, %507, %514 : vector<8x128xf32>
    %c128_i32_191 = arith.constant 128 : i32
    %516 = vector.broadcast %c128_i32_191 : i32 to vector<8x128xi32>
    %517 = arith.select %515, %0, %516 : vector<8x128xi1>, vector<8x128xi32>
    %cst_192 = arith.constant dense<2147483647> : vector<8xi32>
    %518 = vector.multi_reduction <minsi>, %517, %cst_192 [1] : vector<8x128xi32> to vector<8xi32>
    %519 = vector.shape_cast %518 : vector<8xi32> to vector<8x1xi32>
    %520 = vector.broadcast %519 : vector<8x1xi32> to vector<8x128xi32>
    %521 = arith.cmpi eq, %0, %520 : vector<8x128xi32>
    %cst_193 = arith.constant 1.000000e+00 : f32
    %cst_194 = arith.constant 0.000000e+00 : f32
    %522 = vector.broadcast %cst_193 : f32 to vector<8x128xf32>
    %523 = vector.broadcast %cst_194 : f32 to vector<8x128xf32>
    %524 = arith.select %521, %522, %523 : vector<8x128xi1>, vector<8x128xf32>
    %c7_i32 = arith.constant 7 : i32
    %cst_195 = arith.constant dense<0.000000e+00> : vector<8x128xf32>
    %525 = tpu.matmul %524, %1, %cst_195 {dimension_numbers = #tpu.dot_dimension_numbers<[1], [0], [0], [1], [0, 0, 1, 1], [], []>} : vector<8x128xf32>, vector<128x128xf32>, vector<8x128xf32> -> vector<8x128xf32>
    %cst_196 = arith.constant dense<0.000000e+00> : vector<8x128xf32>
    %526 = tpu.matmul %479, %3, %cst_196 {dimension_numbers = #tpu.dot_dimension_numbers<[1], [0], [0], [1], [0, 0, 1, 1], [], []>} : vector<8x32xf32>, vector<32x128xf32>, vector<8x128xf32> -> vector<8x128xf32>
    %527 = arith.addf %525, %526 : vector<8x128xf32>
    %528 = arith.addf %527, %7 : vector<8x128xf32>
    %529 = math.tanh %528 : vector<8x128xf32>
    %530 = vector.extract_strided_slice %529 {offsets = [0, 0], sizes = [8, 32], strides = [1, 1]} : vector<8x128xf32> to vector<8x32xf32>
    %cst_197 = arith.constant 5.000000e-01 : f32
    %531 = vector.broadcast %cst_197 : f32 to vector<8x32xf32>
    %532 = arith.mulf %531, %530 : vector<8x32xf32>
    %cst_198 = arith.constant 5.000000e-01 : f32
    %533 = vector.broadcast %cst_198 : f32 to vector<8x32xf32>
    %534 = arith.addf %532, %533 : vector<8x32xf32>
    %535 = vector.extract_strided_slice %529 {offsets = [0, 32], sizes = [8, 32], strides = [1, 1]} : vector<8x128xf32> to vector<8x32xf32>
    %cst_199 = arith.constant 5.000000e-01 : f32
    %536 = vector.broadcast %cst_199 : f32 to vector<8x32xf32>
    %537 = arith.mulf %536, %535 : vector<8x32xf32>
    %cst_200 = arith.constant 5.000000e-01 : f32
    %538 = vector.broadcast %cst_200 : f32 to vector<8x32xf32>
    %539 = arith.addf %537, %538 : vector<8x32xf32>
    %540 = vector.extract_strided_slice %529 {offsets = [0, 64], sizes = [8, 32], strides = [1, 1]} : vector<8x128xf32> to vector<8x32xf32>
    %541 = vector.extract_strided_slice %529 {offsets = [0, 96], sizes = [8, 32], strides = [1, 1]} : vector<8x128xf32> to vector<8x32xf32>
    %cst_201 = arith.constant 5.000000e-01 : f32
    %542 = vector.broadcast %cst_201 : f32 to vector<8x32xf32>
    %543 = arith.mulf %542, %541 : vector<8x32xf32>
    %cst_202 = arith.constant 5.000000e-01 : f32
    %544 = vector.broadcast %cst_202 : f32 to vector<8x32xf32>
    %545 = arith.addf %543, %544 : vector<8x32xf32>
    %546 = arith.mulf %539, %477 : vector<8x32xf32>
    %547 = arith.mulf %534, %540 : vector<8x32xf32>
    %548 = arith.addf %546, %547 : vector<8x32xf32>
    %549 = math.tanh %548 : vector<8x32xf32>
    %550 = arith.mulf %545, %549 : vector<8x32xf32>
    %cst_203 = arith.constant dense<0.000000e+00> : vector<8x128xf32>
    %551 = tpu.matmul %550, %2, %cst_203 {dimension_numbers = #tpu.dot_dimension_numbers<[1], [0], [0], [1], [0, 0, 1, 1], [], []>} : vector<8x32xf32>, vector<32x128xf32>, vector<8x128xf32> -> vector<8x128xf32>
    %cst_204 = arith.constant dense<0.000000e+00> : vector<8x128xf32>
    %552 = tpu.matmul %505, %4, %cst_204 {dimension_numbers = #tpu.dot_dimension_numbers<[1], [0], [0], [1], [0, 0, 1, 1], [], []>} : vector<8x32xf32>, vector<32x128xf32>, vector<8x128xf32> -> vector<8x128xf32>
    %553 = arith.addf %551, %552 : vector<8x128xf32>
    %554 = arith.addf %553, %10 : vector<8x128xf32>
    %555 = math.tanh %554 : vector<8x128xf32>
    %556 = vector.extract_strided_slice %555 {offsets = [0, 0], sizes = [8, 32], strides = [1, 1]} : vector<8x128xf32> to vector<8x32xf32>
    %cst_205 = arith.constant 5.000000e-01 : f32
    %557 = vector.broadcast %cst_205 : f32 to vector<8x32xf32>
    %558 = arith.mulf %557, %556 : vector<8x32xf32>
    %cst_206 = arith.constant 5.000000e-01 : f32
    %559 = vector.broadcast %cst_206 : f32 to vector<8x32xf32>
    %560 = arith.addf %558, %559 : vector<8x32xf32>
    %561 = vector.extract_strided_slice %555 {offsets = [0, 32], sizes = [8, 32], strides = [1, 1]} : vector<8x128xf32> to vector<8x32xf32>
    %cst_207 = arith.constant 5.000000e-01 : f32
    %562 = vector.broadcast %cst_207 : f32 to vector<8x32xf32>
    %563 = arith.mulf %562, %561 : vector<8x32xf32>
    %cst_208 = arith.constant 5.000000e-01 : f32
    %564 = vector.broadcast %cst_208 : f32 to vector<8x32xf32>
    %565 = arith.addf %563, %564 : vector<8x32xf32>
    %566 = vector.extract_strided_slice %555 {offsets = [0, 64], sizes = [8, 32], strides = [1, 1]} : vector<8x128xf32> to vector<8x32xf32>
    %567 = vector.extract_strided_slice %555 {offsets = [0, 96], sizes = [8, 32], strides = [1, 1]} : vector<8x128xf32> to vector<8x32xf32>
    %cst_209 = arith.constant 5.000000e-01 : f32
    %568 = vector.broadcast %cst_209 : f32 to vector<8x32xf32>
    %569 = arith.mulf %568, %567 : vector<8x32xf32>
    %cst_210 = arith.constant 5.000000e-01 : f32
    %570 = vector.broadcast %cst_210 : f32 to vector<8x32xf32>
    %571 = arith.addf %569, %570 : vector<8x32xf32>
    %572 = arith.mulf %565, %503 : vector<8x32xf32>
    %573 = arith.mulf %560, %566 : vector<8x32xf32>
    %574 = arith.addf %572, %573 : vector<8x32xf32>
    %575 = math.tanh %574 : vector<8x32xf32>
    %576 = arith.mulf %571, %575 : vector<8x32xf32>
    %cst_211 = arith.constant dense<0.000000e+00> : vector<8x128xf32>
    %577 = tpu.matmul %576, %11, %cst_211 {dimension_numbers = #tpu.dot_dimension_numbers<[1], [0], [0], [1], [0, 0, 1, 1], [], []>} : vector<8x32xf32>, vector<32x128xf32>, vector<8x128xf32> -> vector<8x128xf32>
    %578 = arith.addf %577, %14 : vector<8x128xf32>
    %579 = arith.index_cast %c7_i32 : i32 to index
    %c0_212 = arith.constant 0 : index
    %c0_213 = arith.constant 0 : index
    %580 = vector.load %arg10[%579, %c0_212, %c0_213] : memref<8x8x128xf32, #tpu.memory_space<vmem>>, vector<1x8x128xf32>
    %581 = vector.shape_cast %580 : vector<1x8x128xf32> to vector<8x128xf32>
    %582 = vector.shape_cast %578 : vector<8x128xf32> to vector<1x8x128xf32>
    tpu.vector_store %arg10[%579, %c0_212, %c0_213], %582 {strides = array<i32>} : memref<8x8x128xf32, #tpu.memory_space<vmem>>, vector<1x8x128xf32>,
    %cst_214 = arith.constant dense<0xFF800000> : vector<8xf32>
    %583 = vector.multi_reduction <maximumf>, %578, %cst_214 [1] : vector<8x128xf32> to vector<8xf32>
    %584 = vector.shape_cast %583 : vector<8xf32> to vector<8x1xf32>
    %585 = vector.broadcast %584 : vector<8x1xf32> to vector<8x128xf32>
    %586 = arith.cmpf oeq, %578, %585 : vector<8x128xf32>
    %c128_i32_215 = arith.constant 128 : i32
    %587 = vector.broadcast %c128_i32_215 : i32 to vector<8x128xi32>
    %588 = arith.select %586, %0, %587 : vector<8x128xi1>, vector<8x128xi32>
    %cst_216 = arith.constant dense<2147483647> : vector<8xi32>
    %589 = vector.multi_reduction <minsi>, %588, %cst_216 [1] : vector<8x128xi32> to vector<8xi32>
    %590 = vector.shape_cast %589 : vector<8xi32> to vector<8x1xi32>
    %591 = vector.broadcast %590 : vector<8x1xi32> to vector<8x128xi32>
    %592 = arith.cmpi eq, %0, %591 : vector<8x128xi32>
    %cst_217 = arith.constant 1.000000e+00 : f32
    %cst_218 = arith.constant 0.000000e+00 : f32
    %593 = vector.broadcast %cst_217 : f32 to vector<8x128xf32>
    %594 = vector.broadcast %cst_218 : f32 to vector<8x128xf32>
    %595 = arith.select %592, %593, %594 : vector<8x128xi1>, vector<8x128xf32>
    %c8_i32 = arith.constant 8 : i32
    return
  }
}

</mosaic_0001>

<llo_original>
// kernel: tpu_custom_call.1
$region0: #{tpu_custom_call.1}
  #allocation0 [shape = 'u32[]', space=smem, size = 0x4, offset = 0x4, fixed_abs, tag = 'smem constant byte address 0x4 - core index']
  #allocation1 [shape = 'u32[72,128]{1,0:T(1,128)}', space=vmem, size = 0x9000, scoped, tag = 'internal scratch']
  %s0 = inlined_call_operand.hbm [shape: f32[2,8,32], index: 0, kind: input, shape index: {}]
  %s1 = inlined_call_operand.hbm [shape: f32[2,8,32], index: 1, kind: input, shape index: {}]
  %s2 = inlined_call_operand.hbm [shape: f32[128,128], index: 2, kind: input, shape index: {}]
  %s3 = inlined_call_operand.hbm [shape: f32[32,128], index: 3, kind: input, shape index: {}]
  %s4 = inlined_call_operand.hbm [shape: f32[32,128], index: 4, kind: input, shape index: {}]
  %s5 = inlined_call_operand.hbm [shape: f32[32,128], index: 5, kind: input, shape index: {}]
  %s6 = inlined_call_operand.vmem [shape: f32[1,128], index: 6, kind: input, shape index: {}]
  %s7 = inlined_call_operand.vmem [shape: f32[1,128], index: 7, kind: input, shape index: {}]
  %s8 = inlined_call_operand.hbm [shape: f32[32,128], index: 8, kind: input, shape index: {}]
  %s9 = inlined_call_operand.vmem [shape: f32[1,128], index: 9, kind: input, shape index: {}]
  %s10 = inlined_call_operand.hbm [shape: f32[8,8,128], index: 10, kind: output, shape index: {}]
  %s11 = sld [smem:[#allocation0]]
  $region78: #{tpu_custom_call.1} parent=0
    _
  %s13 = ssub.s32 1, %s11
  %s14 = scalar_select 0, %s13, %s11
  $region1: #{tpu_custom_call.1} parent=0
    #allocation2 [shape = 'u8[8192]{0}', space=vmem, size = 0x2000, scoped, tag = 'input window, operand 0, single buffered']
    #allocation3 [shape = 's32[1]{0}', space=sflag, size = 0x4, scoped, tag = 'scoped memory for tpu_custom_call.1']
    #allocation4 [shape = 's32[1]{0}', space=sflag, size = 0x4, scoped, tag = 'scoped memory for tpu_custom_call.1']
    #allocation5 [shape = 'u8[8192]{0}', space=vmem, size = 0x2000, scoped, tag = 'input window, operand 1, single buffered']
    #allocation6 [shape = 's32[1]{0}', space=sflag, size = 0x4, scoped, tag = 'scoped memory for tpu_custom_call.1']
    #allocation7 [shape = 'u8[65536]{0}', space=vmem, size = 0x10000, scoped, tag = 'input window, operand 2, single buffered']
    #allocation8 [shape = 'u8[16384]{0}', space=vmem, size = 0x4000, scoped, tag = 'input window, operand 3, single buffered']
    #allocation9 [shape = 's32[1]{0}', space=sflag, size = 0x4, scoped, tag = 'scoped memory for tpu_custom_call.1']
    #allocation10 [shape = 'u8[16384]{0}', space=vmem, size = 0x4000, scoped, tag = 'input window, operand 4, single buffered']
    #allocation11 [shape = 'u8[16384]{0}', space=vmem, size = 0x4000, scoped, tag = 'input window, operand 5, single buffered']
    #allocation12 [shape = 's32[1]{0}', space=sflag, size = 0x4, scoped, tag = 'scoped memory for tpu_custom_call.1']
    #allocation13 [shape = 'u8[16384]{0}', space=vmem, size = 0x4000, scoped, tag = 'input window, operand 8, single buffered']
    #allocation14 [shape = 'u8[32768]{0}', space=vmem, size = 0x8000, scoped, tag = 'output window, operand 0, single buffered']
    %15 = vsyncpa [#allocation3], 0
    %16 = vsyncpa [#allocation6], 0
    %17 = vsyncpa [#allocation9], 0
    %18 = vsyncpa [#allocation12], 0
    %19 = vsyncpa [#allocation4], 0
    // Predicated region
    $region2: #{tpu_custom_call.1} parent=1 // pred_check
      _
    $region3: #{tpu_custom_call.1} parent=1 // pred_check_branch
      %21 = sbr.rel (0) target = $region5
    $region4: #{tpu_custom_call.1} parent=1 // pred_region
      %23 = vsyncadd [#allocation3], 0
      %s24 = sshll.u32 %s0, 4
      %s25 = int_to_ptr.hbm [resolvable:$true] %s24
      %s26 = sshll.u32 [#allocation2], 4
      %s27 = int_to_ptr.vmem [resolvable:$true] %s26
      %32 = dma.hbm_to_vmem [thread:$0]  %s25, 256, %s27, [#allocation3], 128, 128, 8
    $region5: #{tpu_custom_call.1} parent=1 // pred_fallthru
      _
    // Predicated region
    $region6: #{tpu_custom_call.1} parent=1 // pred_check
      _
    $region7: #{tpu_custom_call.1} parent=1 // pred_check_branch
      %34 = sbr.rel (0) target = $region9
    $region8: #{tpu_custom_call.1} parent=1 // pred_region
      %36 = vsyncadd [#allocation6], 0
      %s37 = sshll.u32 %s1, 4
      %s38 = int_to_ptr.hbm [resolvable:$true] %s37
      %s39 = sshll.u32 [#allocation5], 4
      %s40 = int_to_ptr.vmem [resolvable:$true] %s39
      %45 = dma.hbm_to_vmem [thread:$0]  %s38, 256, %s40, [#allocation6], 128, 128, 8
    $region9: #{tpu_custom_call.1} parent=1 // pred_fallthru
      _
    // Predicated region
    $region10: #{tpu_custom_call.1} parent=1 // pred_check
      _
    $region11: #{tpu_custom_call.1} parent=1 // pred_check_branch
      %47 = sbr.rel (0) target = $region13
    $region12: #{tpu_custom_call.1} parent=1 // pred_region
      %49 = vsyncadd [#allocation6], 0
      %s50 = sshll.u32 %s2, 4
      %s51 = int_to_ptr.hbm [resolvable:$true] %s50
      %s52 = sshll.u32 [#allocation7], 4
      %s53 = int_to_ptr.vmem [resolvable:$true] %s52
      %58 = dma.hbm_to_vmem [thread:$0]  %s51, 2048, %s53, [#allocation6], 128, 128, 8
    $region13: #{tpu_custom_call.1} parent=1 // pred_fallthru
      _
    // Predicated region
    $region14: #{tpu_custom_call.1} parent=1 // pred_check
      _
    $region15: #{tpu_custom_call.1} parent=1 // pred_check_branch
      %60 = sbr.rel (0) target = $region17
    $region16: #{tpu_custom_call.1} parent=1 // pred_region
      %62 = vsyncadd [#allocation9], 0
      %s63 = sshll.u32 %s3, 4
      %s64 = int_to_ptr.hbm [resolvable:$true] %s63
      %s65 = sshll.u32 [#allocation8], 4
      %s66 = int_to_ptr.vmem [resolvable:$true] %s65
      %71 = dma.hbm_to_vmem [thread:$0]  %s64, 512, %s66, [#allocation9], 128, 128, 8
    $region17: #{tpu_custom_call.1} parent=1 // pred_fallthru
      _
    // Predicated region
    $region18: #{tpu_custom_call.1} parent=1 // pred_check
      _
    $region19: #{tpu_custom_call.1} parent=1 // pred_check_branch
      %73 = sbr.rel (0) target = $region21
    $region20: #{tpu_custom_call.1} parent=1 // pred_region
      %75 = vsyncadd [#allocation9], 0
      %s76 = sshll.u32 %s4, 4
      %s77 = int_to_ptr.hbm [resolvable:$true] %s76
      %s78 = sshll.u32 [#allocation10], 4
      %s79 = int_to_ptr.vmem [resolvable:$true] %s78
      %84 = dma.hbm_to_vmem [thread:$0]  %s77, 512, %s79, [#allocation9], 128, 128, 8
    $region21: #{tpu_custom_call.1} parent=1 // pred_fallthru
      _
    // Predicated region
    $region22: #{tpu_custom_call.1} parent=1 // pred_check
      _
    $region23: #{tpu_custom_call.1} parent=1 // pred_check_branch
      %86 = sbr.rel (0) target = $region25
    $region24: #{tpu_custom_call.1} parent=1 // pred_region
      %88 = vsyncadd [#allocation12], 0
      %s89 = sshll.u32 %s5, 4
      %s90 = int_to_ptr.hbm [resolvable:$true] %s89
      %s91 = sshll.u32 [#allocation11], 4
      %s92 = int_to_ptr.vmem [resolvable:$true] %s91
      %97 = dma.hbm_to_vmem [thread:$0]  %s90, 512, %s92, [#allocation12], 128, 128, 8
    $region25: #{tpu_custom_call.1} parent=1 // pred_fallthru
      _
    // Predicated region
    $region26: #{tpu_custom_call.1} parent=1 // pred_check
      _
    $region27: #{tpu_custom_call.1} parent=1 // pred_check_branch
      %99 = sbr.rel (0) target = $region29
    $region28: #{tpu_custom_call.1} parent=1 // pred_region
      _
    $region29: #{tpu_custom_call.1} parent=1 // pred_fallthru
      _
    // Predicated region
    $region30: #{tpu_custom_call.1} parent=1 // pred_check
      _
    $region31: #{tpu_custom_call.1} parent=1 // pred_check_branch
      %101 = sbr.rel (0) target = $region33
    $region32: #{tpu_custom_call.1} parent=1 // pred_region
      _
    $region33: #{tpu_custom_call.1} parent=1 // pred_fallthru
      _
    // Predicated region
    $region34: #{tpu_custom_call.1} parent=1 // pred_check
      _
    $region35: #{tpu_custom_call.1} parent=1 // pred_check_branch
      %103 = sbr.rel (0) target = $region37
    $region36: #{tpu_custom_call.1} parent=1 // pred_region
      %105 = vsyncadd [#allocation12], 0
      %s106 = sshll.u32 %s8, 4
      %s107 = int_to_ptr.hbm [resolvable:$true] %s106
      %s108 = sshll.u32 [#allocation13], 4
      %s109 = int_to_ptr.vmem [resolvable:$true] %s108
      %114 = dma.hbm_to_vmem [thread:$0]  %s107, 512, %s109, [#allocation12], 128, 128, 8
    $region37: #{tpu_custom_call.1} parent=1 // pred_fallthru
      _
    // Predicated region
    $region38: #{tpu_custom_call.1} parent=1 // pred_check
      _
    $region39: #{tpu_custom_call.1} parent=1 // pred_check_branch
      %116 = sbr.rel (0) target = $region41
    $region40: #{tpu_custom_call.1} parent=1 // pred_region
      _
    $region41: #{tpu_custom_call.1} parent=1 // pred_fallthru
      _
    // Predicated region
    $region42: #{tpu_custom_call.1} parent=1 // pred_check
      _
    $region43: #{tpu_custom_call.1} parent=1 // pred_check_branch
      %118 = sbr.rel (0) target = $region45
    $region44: #{tpu_custom_call.1} parent=1 // pred_region
      %120 = dma.done [#allocation3], 256
    $region45: #{tpu_custom_call.1} parent=1 // pred_fallthru
      _
    // Predicated region
    $region46: #{tpu_custom_call.1} parent=1 // pred_check
      _
    $region47: #{tpu_custom_call.1} parent=1 // pred_check_branch
      %122 = sbr.rel (0) target = $region49
    $region48: #{tpu_custom_call.1} parent=1 // pred_region
      %124 = dma.done [#allocation6], 256
    $region49: #{tpu_custom_call.1} parent=1 // pred_fallthru
      _
    // Predicated region
    $region50: #{tpu_custom_call.1} parent=1 // pred_check
      _
    $region51: #{tpu_custom_call.1} parent=1 // pred_check_branch
      %126 = sbr.rel (0) target = $region53
    $region52: #{tpu_custom_call.1} parent=1 // pred_region
      %128 = dma.done [#allocation6], 2048
    $region53: #{tpu_custom_call.1} parent=1 // pred_fallthru
      _
    // Predicated region
    $region54: #{tpu_custom_call.1} parent=1 // pred_check
      _
    $region55: #{tpu_custom_call.1} parent=1 // pred_check_branch
      %130 = sbr.rel (0) target = $region57
    $region56: #{tpu_custom_call.1} parent=1 // pred_region
      %132 = dma.done [#allocation9], 512
    $region57: #{tpu_custom_call.1} parent=1 // pred_fallthru
      _
    // Predicated region
    $region58: #{tpu_custom_call.1} parent=1 // pred_check
      _
    $region59: #{tpu_custom_call.1} parent=1 // pred_check_branch
      %134 = sbr.rel (0) target = $region61
    $region60: #{tpu_custom_call.1} parent=1 // pred_region
      %136 = dma.done [#allocation9], 512
    $region61: #{tpu_custom_call.1} parent=1 // pred_fallthru
      _
    // Predicated region
    $region62: #{tpu_custom_call.1} parent=1 // pred_check
      _
    $region63: #{tpu_custom_call.1} parent=1 // pred_check_branch
      %138 = sbr.rel (0) target = $region65
    $region64: #{tpu_custom_call.1} parent=1 // pred_region
      %140 = dma.done [#allocation12], 512
    $region65: #{tpu_custom_call.1} parent=1 // pred_fallthru
      _
    // Predicated region
    $region66: #{tpu_custom_call.1} parent=1 // pred_check
      _
    $region67: #{tpu_custom_call.1} parent=1 // pred_check_branch
      %142 = sbr.rel (0) target = $region69
    $region68: #{tpu_custom_call.1} parent=1 // pred_region
      %144 = dma.done [#allocation12], 512
    $region69: #{tpu_custom_call.1} parent=1 // pred_fallthru
      _
    %v145 = vlaneseq
    %v146 = vand.u32 %v145, 127
    %v147 = vld [vmem:[#allocation7] sm:$0xff]
    %v148 = vld [vmem:[#allocation7 + $0x8] sm:$0xff]
    %v149 = vld [vmem:[#allocation7 + $0x10] sm:$0xff]
    %v150 = vld [vmem:[#allocation7 + $0x18] sm:$0xff]
    %v151 = vld [vmem:[#allocation7 + $0x20] sm:$0xff]
    %v152 = vld [vmem:[#allocation7 + $0x28] sm:$0xff]
    %v153 = vld [vmem:[#allocation7 + $0x30] sm:$0xff]
    %v154 = vld [vmem:[#allocation7 + $0x38] sm:$0xff]
    %v155 = vld [vmem:[#allocation7 + $0x40] sm:$0xff]
    %v156 = vld [vmem:[#allocation7 + $0x48] sm:$0xff]
    %v157 = vld [vmem:[#allocation7 + $0x50] sm:$0xff]
    %v158 = vld [vmem:[#allocation7 + $0x58] sm:$0xff]
    %v159 = vld [vmem:[#allocation7 + $0x60] sm:$0xff]
    %v160 = vld [vmem:[#allocation7 + $0x68] sm:$0xff]
    %v161 = vld [vmem:[#allocation7 + $0x70] sm:$0xff]
    %v162 = vld [vmem:[#allocation7 + $0x78] sm:$0xff]
    %v163 = vld [vmem:[#allocation8] sm:$0xff]
    %v164 = vld [vmem:[#allocation8 + $0x8] sm:$0xff]
    %v165 = vld [vmem:[#allocation8 + $0x10] sm:$0xff]
    %v166 = vld [vmem:[#allocation8 + $0x18] sm:$0xff]
    %v167 = vld [vmem:[#allocation10] sm:$0xff]
    %v168 = vld [vmem:[#allocation10 + $0x8] sm:$0xff]
    %v169 = vld [vmem:[#allocation10 + $0x10] sm:$0xff]
    %v170 = vld [vmem:[#allocation10 + $0x18] sm:$0xff]
    %v171 = vld [vmem:[#allocation11] sm:$0xff]
    %v172 = vld [vmem:[#allocation11 + $0x8] sm:$0xff]
    %v173 = vld [vmem:[#allocation11 + $0x10] sm:$0xff]
    %v174 = vld [vmem:[#allocation11 + $0x18] sm:$0xff]
    %v175 = vld [vmem:[%s6] sm:$0x1]
    %v177 = vperm.slane %v175, 0
    %v179 = vld [vmem:[%s7] sm:$0x1]
    %v181 = vperm.slane %v179, 0
    %v183 = vld [vmem:[#allocation13] sm:$0xff]
    %v184 = vld [vmem:[#allocation13 + $0x8] sm:$0xff]
    %v185 = vld [vmem:[#allocation13 + $0x10] sm:$0xff]
    %v186 = vld [vmem:[#allocation13 + $0x18] sm:$0xff]
    %v187 = vld [vmem:[%s9] sm:$0x1]
    %v189 = vperm.slane %v187, 0
    %vm191 = vcmp.eq.s32.totalorder %v146, 3
    %v192 = vsel %vm191, 1.0, 0.0
    %v193 = vld [vmem:[#allocation2] sm:$0xff]
    %s194 = scalar_lea.vmem [#allocation2], 8
    %v195 = vld [vmem:[%s194] sm:$0xff]
    %v196 = vld [vmem:[#allocation5] sm:$0xff]
    %s197 = scalar_lea.vmem [#allocation5], 8
    %v198 = vld [vmem:[%s197] sm:$0xff]
    %vm199 = vcmask 261120
    %v201 = vsel %vm199, %v193, 0
    %203 = vmatpush.msra.mxu0 0.0
    %204 = vmatpush.msra.mxu0 0.0
    %205 = vmatpush.msra.mxu0 0.0
    %206 = vmatpush.msra.mxu0 0.0
    %207 = vmatpush.msra.mxu0 0.0
    %208 = vmatpush.msra.mxu0 0.0
    %209 = vmatpush.msra.mxu0 0.0
    %210 = vmatpush.msra.mxu0 0.0
    %211 = vmatpush.msra.mxu0 0.0
    %212 = vmatpush.msra.mxu0 0.0
    %213 = vmatpush.msra.mxu0 0.0
    %214 = vmatpush.msra.mxu0 0.0
    %215 = vmatpush.msra.mxu0 %v170
    %216 = vmatpush.msra.mxu0 %v169
    %217 = vmatpush.msra.mxu0 %v168
    %218 = vmatpush.msra.mxu0 %v167
    %219 = vmatmul.f32.gmra.mxu0 %v201
    %v220 = vpop.f32.mrf.mxu0
    %v221 = vadd.f32 0.0, %v220
    %222 = vdwg.mxu0
    %223 = vmatpush.msra.mxu0 %v162
    %224 = vmatpush.msra.mxu0 %v161
    %225 = vmatpush.msra.mxu0 %v160
    %226 = vmatpush.msra.mxu0 %v159
    %227 = vmatpush.msra.mxu0 %v158
    %228 = vmatpush.msra.mxu0 %v157
    %229 = vmatpush.msra.mxu0 %v156
    %230 = vmatpush.msra.mxu0 %v155
    %231 = vmatpush.msra.mxu0 %v154
    %232 = vmatpush.msra.mxu0 %v153
    %233 = vmatpush.msra.mxu0 %v152
    %234 = vmatpush.msra.mxu0 %v151
    %235 = vmatpush.msra.mxu0 %v150
    %236 = vmatpush.msra.mxu0 %v149
    %237 = vmatpush.msra.mxu0 %v148
    %238 = vmatpush.msra.mxu0 %v147
    %239 = vmatmul.f32.gmra.mxu0 %v192
    %v240 = vpop.f32.mrf.mxu0
    %v241 = vadd.f32 %v221, %v240
    %242 = vdwg.mxu0
    %v243 = vadd.f32 %v241, %v177
    %v244 = vtanh.pop %v243
    %v245 = vmul.f32 %v244, 0.5
    %v246 = vadd.f32 %v245, 0.5
    %248 = vrot.lane.b32.xlu0 %v196, 32
    %v249 = vpop.permute.xlu0 %248
    %v251 = vmul.f32 %v246, %v249
    %253 = vrot.lane.b32.xlu0 %v244, 64
    %v254 = vpop.permute.xlu0 %253
    %v256 = vmul.f32 %v246, %v254
    %258 = vrot.lane.b32.xlu0 %v256, 32
    %v259 = vpop.permute.xlu0 %258
    %v261 = vadd.f32 %v251, %v259
    %v262 = vtanh.pop %v261
    %264 = vrot.lane.b32.xlu0 %v262, 64
    %v265 = vpop.permute.xlu0 %264
    %v267 = vmul.f32 %v246, %v265
    %v269 = vsel %vm199, %v195, 0
    %271 = vmatpush.msra.mxu0 0.0
    %272 = vmatpush.msra.mxu0 0.0
    %273 = vmatpush.msra.mxu0 0.0
    %274 = vmatpush.msra.mxu0 0.0
    %275 = vmatpush.msra.mxu0 0.0
    %276 = vmatpush.msra.mxu0 0.0
    %277 = vmatpush.msra.mxu0 0.0
    %278 = vmatpush.msra.mxu0 0.0
    %279 = vmatpush.msra.mxu0 0.0
    %280 = vmatpush.msra.mxu0 0.0
    %281 = vmatpush.msra.mxu0 0.0
    %282 = vmatpush.msra.mxu0 0.0
    %283 = vmatpush.msra.mxu0 %v174
    %284 = vmatpush.msra.mxu0 %v173
    %285 = vmatpush.msra.mxu0 %v172
    %286 = vmatpush.msra.mxu0 %v171
    %287 = vmatmul.f32.gmra.mxu0 %v269
    %v288 = vpop.f32.mrf.mxu0
    %v289 = vadd.f32 0.0, %v288
    %290 = vdwg.mxu0
    %292 = vrot.lane.b32.xlu0 %v267, 32
    %v293 = vpop.permute.xlu0 %292
    %v294 = vsel %vm199, %v293, 0
    %296 = vmatpush.msra.mxu0 0.0
    %297 = vmatpush.msra.mxu0 0.0
    %298 = vmatpush.msra.mxu0 0.0
    %299 = vmatpush.msra.mxu0 0.0
    %300 = vmatpush.msra.mxu0 0.0
    %301 = vmatpush.msra.mxu0 0.0
    %302 = vmatpush.msra.mxu0 0.0
    %303 = vmatpush.msra.mxu0 0.0
    %304 = vmatpush.msra.mxu0 0.0
    %305 = vmatpush.msra.mxu0 0.0
    %306 = vmatpush.msra.mxu0 0.0
    %307 = vmatpush.msra.mxu0 0.0
    %308 = vmatpush.msra.mxu0 %v166
    %309 = vmatpush.msra.mxu0 %v165
    %310 = vmatpush.msra.mxu0 %v164
    %311 = vmatpush.msra.mxu0 %v163
    %312 = vmatmul.f32.gmra.mxu0 %v294
    %v313 = vpop.f32.mrf.mxu0
    %v314 = vadd.f32 %v289, %v313
    %315 = vdwg.mxu0
    %v316 = vadd.f32 %v314, %v181
    %v317 = vtanh.pop %v316
    %v318 = vmul.f32 %v317, 0.5
    %v319 = vadd.f32 %v318, 0.5
    %321 = vrot.lane.b32.xlu0 %v198, 32
    %v322 = vpop.permute.xlu0 %321
    %v324 = vmul.f32 %v319, %v322
    %326 = vrot.lane.b32.xlu0 %v317, 64
    %v327 = vpop.permute.xlu0 %326
    %v329 = vmul.f32 %v319, %v327
    %331 = vrot.lane.b32.xlu0 %v329, 32
    %v332 = vpop.permute.xlu0 %331
    %v334 = vadd.f32 %v324, %v332
    %v335 = vtanh.pop %v334
    %337 = vrot.lane.b32.xlu0 %v335, 64
    %v338 = vpop.permute.xlu0 %337
    %v340 = vmul.f32 %v319, %v338
    %342 = vrot.lane.b32.xlu0 %v340, 32
    %v343 = vpop.permute.xlu0 %342
    %v344 = vsel %vm199, %v343, 0
    %346 = vmatpush.msra.mxu0 0.0
    %347 = vmatpush.msra.mxu0 0.0
    %348 = vmatpush.msra.mxu0 0.0
    %349 = vmatpush.msra.mxu0 0.0
    %350 = vmatpush.msra.mxu0 0.0
    %351 = vmatpush.msra.mxu0 0.0
    %352 = vmatpush.msra.mxu0 0.0
    %353 = vmatpush.msra.mxu0 0.0
    %354 = vmatpush.msra.mxu0 0.0
    %355 = vmatpush.msra.mxu0 0.0
    %356 = vmatpush.msra.mxu0 0.0
    %357 = vmatpush.msra.mxu0 0.0
    %358 = vmatpush.msra.mxu0 %v186
    %359 = vmatpush.msra.mxu0 %v185
    %360 = vmatpush.msra.mxu0 %v184
    %361 = vmatpush.msra.mxu0 %v183
    %362 = vmatmul.f32.gmra.mxu0 %v344
    %v363 = vpop.f32.mrf.mxu0
    %v364 = vadd.f32 %v189, %v363
    %365 = vdwg.mxu0
    %366 = vst [vmem:[#allocation14] sm:$0xff] %v364
    %367 = vmax.xlane.f32.xlu0 %v364
    %v368 = vpop.xlane.xlu0 %367
    %vm369 = vcmp.eq.f32.partialorder %v364, %v368
    %v370 = vsel %vm369, %v146, 128
    %v371 = vand.u32 %v370, 65535
    %v372 = vshra.s32 %v370, 16
    %v373 = vcvt.s32.f32 %v371
    %v374 = vcvt.s32.f32 %v372
    %375 = vmin.xlane.f32.xlu0 %v374
    %v376 = vpop.xlane.xlu0 %375
    %vm377 = vcmp.eq.f32.partialorder %v374, %v376
    %v378 = vsel %vm377, %v373, inf
    %379 = vmin.xlane.f32.xlu0 %v378
    %v380 = vpop.xlane.xlu0 %379
    %v381 = vcvt.f32.s32 %v380
    %v382 = vcvt.f32.s32 %v376
    %v383 = vshll.u32 %v382, 16
    %v384 = vadd.s32 %v383, %v381
    %vm385 = vcmp.eq.s32.totalorder %v146, %v384
    %v386 = vsel %vm385, 1.0, 0.0
    %387 = vmatpush.msra.mxu0 0.0
    %388 = vmatpush.msra.mxu0 0.0
    %389 = vmatpush.msra.mxu0 0.0
    %390 = vmatpush.msra.mxu0 0.0
    %391 = vmatpush.msra.mxu0 0.0
    %392 = vmatpush.msra.mxu0 0.0
    %393 = vmatpush.msra.mxu0 0.0
    %394 = vmatpush.msra.mxu0 0.0
    %395 = vmatpush.msra.mxu0 0.0
    %396 = vmatpush.msra.mxu0 0.0
    %397 = vmatpush.msra.mxu0 0.0
    %398 = vmatpush.msra.mxu0 0.0
    %399 = vmatpush.msra.mxu0 %v170
    %400 = vmatpush.msra.mxu0 %v169
    %401 = vmatpush.msra.mxu0 %v168
    %402 = vmatpush.msra.mxu0 %v167
    %403 = vmatmul.f32.gmra.mxu0 %v294
    %v404 = vpop.f32.mrf.mxu0
    %v405 = vadd.f32 0.0, %v404
    %406 = vdwg.mxu0
    %407 = vmatpush.msra.mxu0 %v162
    %408 = vmatpush.msra.mxu0 %v161
    %409 = vmatpush.msra.mxu0 %v160
    %410 = vmatpush.msra.mxu0 %v159
    %411 = vmatpush.msra.mxu0 %v158
    %412 = vmatpush.msra.mxu0 %v157
    %413 = vmatpush.msra.mxu0 %v156
    %414 = vmatpush.msra.mxu0 %v155
    %415 = vmatpush.msra.mxu0 %v154
    %416 = vmatpush.msra.mxu0 %v153
    %417 = vmatpush.msra.mxu0 %v152
    %418 = vmatpush.msra.mxu0 %v151
    %419 = vmatpush.msra.mxu0 %v150
    %420 = vmatpush.msra.mxu0 %v149
    %421 = vmatpush.msra.mxu0 %v148
    %422 = vmatpush.msra.mxu0 %v147
    %423 = vmatmul.f32.gmra.mxu0 %v386
    %v424 = vpop.f32.mrf.mxu0
    %v425 = vadd.f32 %v405, %v424
    %426 = vdwg.mxu0
    %v427 = vadd.f32 %v425, %v177
    %v428 = vtanh.pop %v427
    %v429 = vmul.f32 %v428, 0.5
    %v430 = vadd.f32 %v429, 0.5
    %v431 = vmul.f32 %v430, %v261
    %433 = vrot.lane.b32.xlu0 %v428, 64
    %v434 = vpop.permute.xlu0 %433
    %v436 = vmul.f32 %v430, %v434
    %438 = vrot.lane.b32.xlu0 %v436, 32
    %v439 = vpop.permute.xlu0 %438
    %v441 = vadd.f32 %v431, %v439
    %v442 = vtanh.pop %v441
    %444 = vrot.lane.b32.xlu0 %v442, 64
    %v445 = vpop.permute.xlu0 %444
    %v447 = vmul.f32 %v430, %v445
    %448 = vmatpush.msra.mxu0 0.0
    %449 = vmatpush.msra.mxu0 0.0
    %450 = vmatpush.msra.mxu0 0.0
    %451 = vmatpush.msra.mxu0 0.0
    %452 = vmatpush.msra.mxu0 0.0
    %453 = vmatpush.msra.mxu0 0.0
    %454 = vmatpush.msra.mxu0 0.0
    %455 = vmatpush.msra.mxu0 0.0
    %456 = vmatpush.msra.mxu0 0.0
    %457 = vmatpush.msra.mxu0 0.0
    %458 = vmatpush.msra.mxu0 0.0
    %459 = vmatpush.msra.mxu0 0.0
    %460 = vmatpush.msra.mxu0 %v174
    %461 = vmatpush.msra.mxu0 %v173
    %462 = vmatpush.msra.mxu0 %v172
    %463 = vmatpush.msra.mxu0 %v171
    %464 = vmatmul.f32.gmra.mxu0 %v344
    %v465 = vpop.f32.mrf.mxu0
    %v466 = vadd.f32 0.0, %v465
    %467 = vdwg.mxu0
    %469 = vrot.lane.b32.xlu0 %v447, 32
    %v470 = vpop.permute.xlu0 %469
    %v471 = vsel %vm199, %v470, 0
    %473 = vmatpush.msra.mxu0 0.0
    %474 = vmatpush.msra.mxu0 0.0
    %475 = vmatpush.msra.mxu0 0.0
    %476 = vmatpush.msra.mxu0 0.0
    %477 = vmatpush.msra.mxu0 0.0
    %478 = vmatpush.msra.mxu0 0.0
    %479 = vmatpush.msra.mxu0 0.0
    %480 = vmatpush.msra.mxu0 0.0
    %481 = vmatpush.msra.mxu0 0.0
    %482 = vmatpush.msra.mxu0 0.0
    %483 = vmatpush.msra.mxu0 0.0
    %484 = vmatpush.msra.mxu0 0.0
    %485 = vmatpush.msra.mxu0 %v166
    %486 = vmatpush.msra.mxu0 %v165
    %487 = vmatpush.msra.mxu0 %v164
    %488 = vmatpush.msra.mxu0 %v163
    %489 = vmatmul.f32.gmra.mxu0 %v471
    %v490 = vpop.f32.mrf.mxu0
    %v491 = vadd.f32 %v466, %v490
    %492 = vdwg.mxu0
    %v493 = vadd.f32 %v491, %v181
    %v494 = vtanh.pop %v493
    %v495 = vmul.f32 %v494, 0.5
    %v496 = vadd.f32 %v495, 0.5
    %v497 = vmul.f32 %v496, %v334
    %499 = vrot.lane.b32.xlu0 %v494, 64
    %v500 = vpop.permute.xlu0 %499
    %v502 = vmul.f32 %v496, %v500
    %504 = vrot.lane.b32.xlu0 %v502, 32
    %v505 = vpop.permute.xlu0 %504
    %v507 = vadd.f32 %v497, %v505
    %v508 = vtanh.pop %v507
    %510 = vrot.lane.b32.xlu0 %v508, 64
    %v511 = vpop.permute.xlu0 %510
    %v513 = vmul.f32 %v496, %v511
    %515 = vrot.lane.b32.xlu0 %v513, 32
    %v516 = vpop.permute.xlu0 %515
    %v517 = vsel %vm199, %v516, 0
    %519 = vmatpush.msra.mxu0 0.0
    %520 = vmatpush.msra.mxu0 0.0
    %521 = vmatpush.msra.mxu0 0.0
    %522 = vmatpush.msra.mxu0 0.0
    %523 = vmatpush.msra.mxu0 0.0
    %524 = vmatpush.msra.mxu0 0.0
    %525 = vmatpush.msra.mxu0 0.0
    %526 = vmatpush.msra.mxu0 0.0
    %527 = vmatpush.msra.mxu0 0.0
    %528 = vmatpush.msra.mxu0 0.0
    %529 = vmatpush.msra.mxu0 0.0
    %530 = vmatpush.msra.mxu0 0.0
    %531 = vmatpush.msra.mxu0 %v186
    %532 = vmatpush.msra.mxu0 %v185
    %533 = vmatpush.msra.mxu0 %v184
    %534 = vmatpush.msra.mxu0 %v183
    %535 = vmatmul.f32.gmra.mxu0 %v517
    %v536 = vpop.f32.mrf.mxu0
    %v537 = vadd.f32 %v189, %v536
    %538 = vdwg.mxu0
    %s539 = scalar_lea.vmem [#allocation14], 8
    %540 = vst [vmem:[%s539] sm:$0xff] %v537
    %541 = vmax.xlane.f32.xlu0 %v537
    %v542 = vpop.xlane.xlu0 %541
    %vm543 = vcmp.eq.f32.partialorder %v537, %v542
    %v544 = vsel %vm543, %v146, 128
    %v545 = vand.u32 %v544, 65535
    %v546 = vshra.s32 %v544, 16
    %v547 = vcvt.s32.f32 %v545
    %v548 = vcvt.s32.f32 %v546
    %549 = vmin.xlane.f32.xlu0 %v548
    %v550 = vpop.xlane.xlu0 %549
    %vm551 = vcmp.eq.f32.partialorder %v548, %v550
    %v552 = vsel %vm551, %v547, inf
    %553 = vmin.xlane.f32.xlu0 %v552
    %v554 = vpop.xlane.xlu0 %553
    %v555 = vcvt.f32.s32 %v554
    %v556 = vcvt.f32.s32 %v550
    %v557 = vshll.u32 %v556, 16
    %v558 = vadd.s32 %v557, %v555
    %vm559 = vcmp.eq.s32.totalorder %v146, %v558
    %v560 = vsel %vm559, 1.0, 0.0
    %561 = vmatpush.msra.mxu0 0.0
    %562 = vmatpush.msra.mxu0 0.0
    %563 = vmatpush.msra.mxu0 0.0
    %564 = vmatpush.msra.mxu0 0.0
    %565 = vmatpush.msra.mxu0 0.0
    %566 = vmatpush.msra.mxu0 0.0
    %567 = vmatpush.msra.mxu0 0.0
    %568 = vmatpush.msra.mxu0 0.0
    %569 = vmatpush.msra.mxu0 0.0
    %570 = vmatpush.msra.mxu0 0.0
    %571 = vmatpush.msra.mxu0 0.0
    %572 = vmatpush.msra.mxu0 0.0
    %573 = vmatpush.msra.mxu0 %v170
    %574 = vmatpush.msra.mxu0 %v169
    %575 = vmatpush.msra.mxu0 %v168
    %576 = vmatpush.msra.mxu0 %v167
    %577 = vmatmul.f32.gmra.mxu0 %v471
    %v578 = vpop.f32.mrf.mxu0
    %v579 = vadd.f32 0.0, %v578
    %580 = vdwg.mxu0
    %581 = vmatpush.msra.mxu0 %v162
    %582 = vmatpush.msra.mxu0 %v161
    %583 = vmatpush.msra.mxu0 %v160
    %584 = vmatpush.msra.mxu0 %v159
    %585 = vmatpush.msra.mxu0 %v158
    %586 = vmatpush.msra.mxu0 %v157
    %587 = vmatpush.msra.mxu0 %v156
    %588 = vmatpush.msra.mxu0 %v155
    %589 = vmatpush.msra.mxu0 %v154
    %590 = vmatpush.msra.mxu0 %v153
    %591 = vmatpush.msra.mxu0 %v152
    %592 = vmatpush.msra.mxu0 %v151
    %593 = vmatpush.msra.mxu0 %v150
    %594 = vmatpush.msra.mxu0 %v149
    %595 = vmatpush.msra.mxu0 %v148
    %596 = vmatpush.msra.mxu0 %v147
    %597 = vmatmul.f32.gmra.mxu0 %v560
    %v598 = vpop.f32.mrf.mxu0
    %v599 = vadd.f32 %v579, %v598
    %600 = vdwg.mxu0
    %v601 = vadd.f32 %v599, %v177
    %v602 = vtanh.pop %v601
    %v603 = vmul.f32 %v602, 0.5
    %v604 = vadd.f32 %v603, 0.5
    %v605 = vmul.f32 %v604, %v441
    %607 = vrot.lane.b32.xlu0 %v602, 64
    %v608 = vpop.permute.xlu0 %607
    %v610 = vmul.f32 %v604, %v608
    %612 = vrot.lane.b32.xlu0 %v610, 32
    %v613 = vpop.permute.xlu0 %612
    %v615 = vadd.f32 %v605, %v613
    %v616 = vtanh.pop %v615
    %618 = vrot.lane.b32.xlu0 %v616, 64
    %v619 = vpop.permute.xlu0 %618
    %v621 = vmul.f32 %v604, %v619
    %622 = vmatpush.msra.mxu0 0.0
    %623 = vmatpush.msra.mxu0 0.0
    %624 = vmatpush.msra.mxu0 0.0
    %625 = vmatpush.msra.mxu0 0.0
    %626 = vmatpush.msra.mxu0 0.0
    %627 = vmatpush.msra.mxu0 0.0
    %628 = vmatpush.msra.mxu0 0.0
    %629 = vmatpush.msra.mxu0 0.0
    %630 = vmatpush.msra.mxu0 0.0
    %631 = vmatpush.msra.mxu0 0.0
    %632 = vmatpush.msra.mxu0 0.0
    %633 = vmatpush.msra.mxu0 0.0
    %634 = vmatpush.msra.mxu0 %v174
    %635 = vmatpush.msra.mxu0 %v173
    %636 = vmatpush.msra.mxu0 %v172
    %637 = vmatpush.msra.mxu0 %v171
    %638 = vmatmul.f32.gmra.mxu0 %v517
    %v639 = vpop.f32.mrf.mxu0
    %v640 = vadd.f32 0.0, %v639
    %641 = vdwg.mxu0
    %643 = vrot.lane.b32.xlu0 %v621, 32
    %v644 = vpop.permute.xlu0 %643
    %v645 = vsel %vm199, %v644, 0
    %647 = vmatpush.msra.mxu0 0.0
    %648 = vmatpush.msra.mxu0 0.0
    %649 = vmatpush.msra.mxu0 0.0
    %650 = vmatpush.msra.mxu0 0.0
    %651 = vmatpush.msra.mxu0 0.0
    %652 = vmatpush.msra.mxu0 0.0
    %653 = vmatpush.msra.mxu0 0.0
    %654 = vmatpush.msra.mxu0 0.0
    %655 = vmatpush.msra.mxu0 0.0
    %656 = vmatpush.msra.mxu0 0.0
    %657 = vmatpush.msra.mxu0 0.0
    %658 = vmatpush.msra.mxu0 0.0
    %659 = vmatpush.msra.mxu0 %v166
    %660 = vmatpush.msra.mxu0 %v165
    %661 = vmatpush.msra.mxu0 %v164
    %662 = vmatpush.msra.mxu0 %v163
    %663 = vmatmul.f32.gmra.mxu0 %v645
    %v664 = vpop.f32.mrf.mxu0
    %v665 = vadd.f32 %v640, %v664
    %666 = vdwg.mxu0
    %v667 = vadd.f32 %v665, %v181
    %v668 = vtanh.pop %v667
    %v669 = vmul.f32 %v668, 0.5
    %v670 = vadd.f32 %v669, 0.5
    %v671 = vmul.f32 %v670, %v507
    %673 = vrot.lane.b32.xlu0 %v668, 64
    %v674 = vpop.permute.xlu0 %673
    %v676 = vmul.f32 %v670, %v674
    %678 = vrot.lane.b32.xlu0 %v676, 32
    %v679 = vpop.permute.xlu0 %678
    %v681 = vadd.f32 %v671, %v679
    %v682 = vtanh.pop %v681
    %684 = vrot.lane.b32.xlu0 %v682, 64
    %v685 = vpop.permute.xlu0 %684
    %v687 = vmul.f32 %v670, %v685
    %689 = vrot.lane.b32.xlu0 %v687, 32
    %v690 = vpop.permute.xlu0 %689
    %v691 = vsel %vm199, %v690, 0
    %693 = vmatpush.msra.mxu0 0.0
    %694 = vmatpush.msra.mxu0 0.0
    %695 = vmatpush.msra.mxu0 0.0
    %696 = vmatpush.msra.mxu0 0.0
    %697 = vmatpush.msra.mxu0 0.0
    %698 = vmatpush.msra.mxu0 0.0
    %699 = vmatpush.msra.mxu0 0.0
    %700 = vmatpush.msra.mxu0 0.0
    %701 = vmatpush.msra.mxu0 0.0
    %702 = vmatpush.msra.mxu0 0.0
    %703 = vmatpush.msra.mxu0 0.0
    %704 = vmatpush.msra.mxu0 0.0
    %705 = vmatpush.msra.mxu0 %v186
    %706 = vmatpush.msra.mxu0 %v185
    %707 = vmatpush.msra.mxu0 %v184
    %708 = vmatpush.msra.mxu0 %v183
    %709 = vmatmul.f32.gmra.mxu0 %v691
    %v710 = vpop.f32.mrf.mxu0
    %v711 = vadd.f32 %v189, %v710
    %712 = vdwg.mxu0
    %s713 = scalar_lea.vmem [#allocation14], 16
    %714 = vst [vmem:[%s713] sm:$0xff] %v711
    %715 = vmax.xlane.f32.xlu0 %v711
    %v716 = vpop.xlane.xlu0 %715
    %vm717 = vcmp.eq.f32.partialorder %v711, %v716
    %v718 = vsel %vm717, %v146, 128
    %v719 = vand.u32 %v718, 65535
    %v720 = vshra.s32 %v718, 16
    %v721 = vcvt.s32.f32 %v719
    %v722 = vcvt.s32.f32 %v720
    %723 = vmin.xlane.f32.xlu0 %v722
    %v724 = vpop.xlane.xlu0 %723
    %vm725 = vcmp.eq.f32.partialorder %v722, %v724
    %v726 = vsel %vm725, %v721, inf
    %727 = vmin.xlane.f32.xlu0 %v726
    %v728 = vpop.xlane.xlu0 %727
    %v729 = vcvt.f32.s32 %v728
    %v730 = vcvt.f32.s32 %v724
    %v731 = vshll.u32 %v730, 16
    %v732 = vadd.s32 %v731, %v729
    %vm733 = vcmp.eq.s32.totalorder %v146, %v732
    %v734 = vsel %vm733, 1.0, 0.0
    %735 = vmatpush.msra.mxu0 0.0
    %736 = vmatpush.msra.mxu0 0.0
    %737 = vmatpush.msra.mxu0 0.0
    %738 = vmatpush.msra.mxu0 0.0
    %739 = vmatpush.msra.mxu0 0.0
    %740 = vmatpush.msra.mxu0 0.0
    %741 = vmatpush.msra.mxu0 0.0
    %742 = vmatpush.msra.mxu0 0.0
    %743 = vmatpush.msra.mxu0 0.0
    %744 = vmatpush.msra.mxu0 0.0
    %745 = vmatpush.msra.mxu0 0.0
    %746 = vmatpush.msra.mxu0 0.0
    %747 = vmatpush.msra.mxu0 %v170
    %748 = vmatpush.msra.mxu0 %v169
    %749 = vmatpush.msra.mxu0 %v168
    %750 = vmatpush.msra.mxu0 %v167
    %751 = vmatmul.f32.gmra.mxu0 %v645
    %v752 = vpop.f32.mrf.mxu0
    %v753 = vadd.f32 0.0, %v752
    %754 = vdwg.mxu0
    %755 = vmatpush.msra.mxu0 %v162
    %756 = vmatpush.msra.mxu0 %v161
    %757 = vmatpush.msra.mxu0 %v160
    %758 = vmatpush.msra.mxu0 %v159
    %759 = vmatpush.msra.mxu0 %v158
    %760 = vmatpush.msra.mxu0 %v157
    %761 = vmatpush.msra.mxu0 %v156
    %762 = vmatpush.msra.mxu0 %v155
    %763 = vmatpush.msra.mxu0 %v154
    %764 = vmatpush.msra.mxu0 %v153
    %765 = vmatpush.msra.mxu0 %v152
    %766 = vmatpush.msra.mxu0 %v151
    %767 = vmatpush.msra.mxu0 %v150
    %768 = vmatpush.msra.mxu0 %v149
    %769 = vmatpush.msra.mxu0 %v148
    %770 = vmatpush.msra.mxu0 %v147
    %771 = vmatmul.f32.gmra.mxu0 %v734
    %v772 = vpop.f32.mrf.mxu0
    %v773 = vadd.f32 %v753, %v772
    %774 = vdwg.mxu0
    %v775 = vadd.f32 %v773, %v177
    %v776 = vtanh.pop %v775
    %v777 = vmul.f32 %v776, 0.5
    %v778 = vadd.f32 %v777, 0.5
    %v779 = vmul.f32 %v778, %v615
    %781 = vrot.lane.b32.xlu0 %v776, 64
    %v782 = vpop.permute.xlu0 %781
    %v784 = vmul.f32 %v778, %v782
    %786 = vrot.lane.b32.xlu0 %v784, 32
    %v787 = vpop.permute.xlu0 %786
    %v789 = vadd.f32 %v779, %v787
    %v790 = vtanh.pop %v789
    %792 = vrot.lane.b32.xlu0 %v790, 64
    %v793 = vpop.permute.xlu0 %792
    %v795 = vmul.f32 %v778, %v793
    %796 = vmatpush.msra.mxu0 0.0
    %797 = vmatpush.msra.mxu0 0.0
    %798 = vmatpush.msra.mxu0 0.0
    %799 = vmatpush.msra.mxu0 0.0
    %800 = vmatpush.msra.mxu0 0.0
    %801 = vmatpush.msra.mxu0 0.0
    %802 = vmatpush.msra.mxu0 0.0
    %803 = vmatpush.msra.mxu0 0.0
    %804 = vmatpush.msra.mxu0 0.0
    %805 = vmatpush.msra.mxu0 0.0
    %806 = vmatpush.msra.mxu0 0.0
    %807 = vmatpush.msra.mxu0 0.0
    %808 = vmatpush.msra.mxu0 %v174
    %809 = vmatpush.msra.mxu0 %v173
    %810 = vmatpush.msra.mxu0 %v172
    %811 = vmatpush.msra.mxu0 %v171
    %812 = vmatmul.f32.gmra.mxu0 %v691
    %v813 = vpop.f32.mrf.mxu0
    %v814 = vadd.f32 0.0, %v813
    %815 = vdwg.mxu0
    %817 = vrot.lane.b32.xlu0 %v795, 32
    %v818 = vpop.permute.xlu0 %817
    %v819 = vsel %vm199, %v818, 0
    %821 = vmatpush.msra.mxu0 0.0
    %822 = vmatpush.msra.mxu0 0.0
    %823 = vmatpush.msra.mxu0 0.0
    %824 = vmatpush.msra.mxu0 0.0
    %825 = vmatpush.msra.mxu0 0.0
    %826 = vmatpush.msra.mxu0 0.0
    %827 = vmatpush.msra.mxu0 0.0
    %828 = vmatpush.msra.mxu0 0.0
    %829 = vmatpush.msra.mxu0 0.0
    %830 = vmatpush.msra.mxu0 0.0
    %831 = vmatpush.msra.mxu0 0.0
    %832 = vmatpush.msra.mxu0 0.0
    %833 = vmatpush.msra.mxu0 %v166
    %834 = vmatpush.msra.mxu0 %v165
    %835 = vmatpush.msra.mxu0 %v164
    %836 = vmatpush.msra.mxu0 %v163
    %837 = vmatmul.f32.gmra.mxu0 %v819
    %v838 = vpop.f32.mrf.mxu0
    %v839 = vadd.f32 %v814, %v838
    %840 = vdwg.mxu0
    %v841 = vadd.f32 %v839, %v181
    %v842 = vtanh.pop %v841
    %v843 = vmul.f32 %v842, 0.5
    %v844 = vadd.f32 %v843, 0.5
    %v845 = vmul.f32 %v844, %v681
    %847 = vrot.lane.b32.xlu0 %v842, 64
    %v848 = vpop.permute.xlu0 %847
    %v850 = vmul.f32 %v844, %v848
    %852 = vrot.lane.b32.xlu0 %v850, 32
    %v853 = vpop.permute.xlu0 %852
    %v855 = vadd.f32 %v845, %v853
    %v856 = vtanh.pop %v855
    %858 = vrot.lane.b32.xlu0 %v856, 64
    %v859 = vpop.permute.xlu0 %858
    %v861 = vmul.f32 %v844, %v859
    %863 = vrot.lane.b32.xlu0 %v861, 32
    %v864 = vpop.permute.xlu0 %863
    %v865 = vsel %vm199, %v864, 0
    %867 = vmatpush.msra.mxu0 0.0
    %868 = vmatpush.msra.mxu0 0.0
    %869 = vmatpush.msra.mxu0 0.0
    %870 = vmatpush.msra.mxu0 0.0
    %871 = vmatpush.msra.mxu0 0.0
    %872 = vmatpush.msra.mxu0 0.0
    %873 = vmatpush.msra.mxu0 0.0
    %874 = vmatpush.msra.mxu0 0.0
    %875 = vmatpush.msra.mxu0 0.0
    %876 = vmatpush.msra.mxu0 0.0
    %877 = vmatpush.msra.mxu0 0.0
    %878 = vmatpush.msra.mxu0 0.0
    %879 = vmatpush.msra.mxu0 %v186
    %880 = vmatpush.msra.mxu0 %v185
    %881 = vmatpush.msra.mxu0 %v184
    %882 = vmatpush.msra.mxu0 %v183
    %883 = vmatmul.f32.gmra.mxu0 %v865
    %v884 = vpop.f32.mrf.mxu0
    %v885 = vadd.f32 %v189, %v884
    %886 = vdwg.mxu0
    %s887 = scalar_lea.vmem [#allocation14], 24
    %888 = vst [vmem:[%s887] sm:$0xff] %v885
    %889 = vmax.xlane.f32.xlu0 %v885
    %v890 = vpop.xlane.xlu0 %889
    %vm891 = vcmp.eq.f32.partialorder %v885, %v890
    %v892 = vsel %vm891, %v146, 128
    %v893 = vand.u32 %v892, 65535
    %v894 = vshra.s32 %v892, 16
    %v895 = vcvt.s32.f32 %v893
    %v896 = vcvt.s32.f32 %v894
    %897 = vmin.xlane.f32.xlu0 %v896
    %v898 = vpop.xlane.xlu0 %897
    %vm899 = vcmp.eq.f32.partialorder %v896, %v898
    %v900 = vsel %vm899, %v895, inf
    %901 = vmin.xlane.f32.xlu0 %v900
    %v902 = vpop.xlane.xlu0 %901
    %v903 = vcvt.f32.s32 %v902
    %v904 = vcvt.f32.s32 %v898
    %v905 = vshll.u32 %v904, 16
    %v906 = vadd.s32 %v905, %v903
    %vm907 = vcmp.eq.s32.totalorder %v146, %v906
    %v908 = vsel %vm907, 1.0, 0.0
    %909 = vmatpush.msra.mxu0 0.0
    %910 = vmatpush.msra.mxu0 0.0
    %911 = vmatpush.msra.mxu0 0.0
    %912 = vmatpush.msra.mxu0 0.0
    %913 = vmatpush.msra.mxu0 0.0
    %914 = vmatpush.msra.mxu0 0.0
    %915 = vmatpush.msra.mxu0 0.0
    %916 = vmatpush.msra.mxu0 0.0
    %917 = vmatpush.msra.mxu0 0.0
    %918 = vmatpush.msra.mxu0 0.0
    %919 = vmatpush.msra.mxu0 0.0
    %920 = vmatpush.msra.mxu0 0.0
    %921 = vmatpush.msra.mxu0 %v170
    %922 = vmatpush.msra.mxu0 %v169
    %923 = vmatpush.msra.mxu0 %v168
    %924 = vmatpush.msra.mxu0 %v167
    %925 = vmatmul.f32.gmra.mxu0 %v819
    %v926 = vpop.f32.mrf.mxu0
    %v927 = vadd.f32 0.0, %v926
    %928 = vdwg.mxu0
    %929 = vmatpush.msra.mxu0 %v162
    %930 = vmatpush.msra.mxu0 %v161
    %931 = vmatpush.msra.mxu0 %v160
    %932 = vmatpush.msra.mxu0 %v159
    %933 = vmatpush.msra.mxu0 %v158
    %934 = vmatpush.msra.mxu0 %v157
    %935 = vmatpush.msra.mxu0 %v156
    %936 = vmatpush.msra.mxu0 %v155
    %937 = vmatpush.msra.mxu0 %v154
    %938 = vmatpush.msra.mxu0 %v153
    %939 = vmatpush.msra.mxu0 %v152
    %940 = vmatpush.msra.mxu0 %v151
    %941 = vmatpush.msra.mxu0 %v150
    %942 = vmatpush.msra.mxu0 %v149
    %943 = vmatpush.msra.mxu0 %v148
    %944 = vmatpush.msra.mxu0 %v147
    %945 = vmatmul.f32.gmra.mxu0 %v908
    %v946 = vpop.f32.mrf.mxu0
    %v947 = vadd.f32 %v927, %v946
    %948 = vdwg.mxu0
    %v949 = vadd.f32 %v947, %v177
    %v950 = vtanh.pop %v949
    %v951 = vmul.f32 %v950, 0.5
    %v952 = vadd.f32 %v951, 0.5
    %v953 = vmul.f32 %v952, %v789
    %955 = vrot.lane.b32.xlu0 %v950, 64
    %v956 = vpop.permute.xlu0 %955
    %v958 = vmul.f32 %v952, %v956
    %960 = vrot.lane.b32.xlu0 %v958, 32
    %v961 = vpop.permute.xlu0 %960
    %v963 = vadd.f32 %v953, %v961
    %v964 = vtanh.pop %v963
    %966 = vrot.lane.b32.xlu0 %v964, 64
    %v967 = vpop.permute.xlu0 %966
    %v969 = vmul.f32 %v952, %v967
    %970 = vmatpush.msra.mxu0 0.0
    %971 = vmatpush.msra.mxu0 0.0
    %972 = vmatpush.msra.mxu0 0.0
    %973 = vmatpush.msra.mxu0 0.0
    %974 = vmatpush.msra.mxu0 0.0
    %975 = vmatpush.msra.mxu0 0.0
    %976 = vmatpush.msra.mxu0 0.0
    %977 = vmatpush.msra.mxu0 0.0
    %978 = vmatpush.msra.mxu0 0.0
    %979 = vmatpush.msra.mxu0 0.0
    %980 = vmatpush.msra.mxu0 0.0
    %981 = vmatpush.msra.mxu0 0.0
    %982 = vmatpush.msra.mxu0 %v174
    %983 = vmatpush.msra.mxu0 %v173
    %984 = vmatpush.msra.mxu0 %v172
    %985 = vmatpush.msra.mxu0 %v171
    %986 = vmatmul.f32.gmra.mxu0 %v865
    %v987 = vpop.f32.mrf.mxu0
    %v988 = vadd.f32 0.0, %v987
    %989 = vdwg.mxu0
    %991 = vrot.lane.b32.xlu0 %v969, 32
    %v992 = vpop.permute.xlu0 %991
    %v993 = vsel %vm199, %v992, 0
    %995 = vmatpush.msra.mxu0 0.0
    %996 = vmatpush.msra.mxu0 0.0
    %997 = vmatpush.msra.mxu0 0.0
    %998 = vmatpush.msra.mxu0 0.0
    %999 = vmatpush.msra.mxu0 0.0
    %1000 = vmatpush.msra.mxu0 0.0
    %1001 = vmatpush.msra.mxu0 0.0
    %1002 = vmatpush.msra.mxu0 0.0
    %1003 = vmatpush.msra.mxu0 0.0
    %1004 = vmatpush.msra.mxu0 0.0
    %1005 = vmatpush.msra.mxu0 0.0
    %1006 = vmatpush.msra.mxu0 0.0
    %1007 = vmatpush.msra.mxu0 %v166
    %1008 = vmatpush.msra.mxu0 %v165
    %1009 = vmatpush.msra.mxu0 %v164
    %1010 = vmatpush.msra.mxu0 %v163
    %1011 = vmatmul.f32.gmra.mxu0 %v993
    %v1012 = vpop.f32.mrf.mxu0
    %v1013 = vadd.f32 %v988, %v1012
    %1014 = vdwg.mxu0
    %v1015 = vadd.f32 %v1013, %v181
    %v1016 = vtanh.pop %v1015
    %v1017 = vmul.f32 %v1016, 0.5
    %v1018 = vadd.f32 %v1017, 0.5
    %v1019 = vmul.f32 %v1018, %v855
    %1021 = vrot.lane.b32.xlu0 %v1016, 64
    %v1022 = vpop.permute.xlu0 %1021
    %v1024 = vmul.f32 %v1018, %v1022
    %1026 = vrot.lane.b32.xlu0 %v1024, 32
    %v1027 = vpop.permute.xlu0 %1026
    %v1029 = vadd.f32 %v1019, %v1027
    %v1030 = vtanh.pop %v1029
    %1032 = vrot.lane.b32.xlu0 %v1030, 64
    %v1033 = vpop.permute.xlu0 %1032
    %v1035 = vmul.f32 %v1018, %v1033
    %1037 = vrot.lane.b32.xlu0 %v1035, 32
    %v1038 = vpop.permute.xlu0 %1037
    %v1039 = vsel %vm199, %v1038, 0
    %1041 = vmatpush.msra.mxu0 0.0
    %1042 = vmatpush.msra.mxu0 0.0
    %1043 = vmatpush.msra.mxu0 0.0
    %1044 = vmatpush.msra.mxu0 0.0
    %1045 = vmatpush.msra.mxu0 0.0
    %1046 = vmatpush.msra.mxu0 0.0
    %1047 = vmatpush.msra.mxu0 0.0
    %1048 = vmatpush.msra.mxu0 0.0
    %1049 = vmatpush.msra.mxu0 0.0
    %1050 = vmatpush.msra.mxu0 0.0
    %1051 = vmatpush.msra.mxu0 0.0
    %1052 = vmatpush.msra.mxu0 0.0
    %1053 = vmatpush.msra.mxu0 %v186
    %1054 = vmatpush.msra.mxu0 %v185
    %1055 = vmatpush.msra.mxu0 %v184
    %1056 = vmatpush.msra.mxu0 %v183
    %1057 = vmatmul.f32.gmra.mxu0 %v1039
    %v1058 = vpop.f32.mrf.mxu0
    %v1059 = vadd.f32 %v189, %v1058
    %1060 = vdwg.mxu0
    %s1061 = scalar_lea.vmem [#allocation14], 32
    %1062 = vst [vmem:[%s1061] sm:$0xff] %v1059
    %1063 = vmax.xlane.f32.xlu0 %v1059
    %v1064 = vpop.xlane.xlu0 %1063
    %vm1065 = vcmp.eq.f32.partialorder %v1059, %v1064
    %v1066 = vsel %vm1065, %v146, 128
    %v1067 = vand.u32 %v1066, 65535
    %v1068 = vshra.s32 %v1066, 16
    %v1069 = vcvt.s32.f32 %v1067
    %v1070 = vcvt.s32.f32 %v1068
    %1071 = vmin.xlane.f32.xlu0 %v1070
    %v1072 = vpop.xlane.xlu0 %1071
    %vm1073 = vcmp.eq.f32.partialorder %v1070, %v1072
    %v1074 = vsel %vm1073, %v1069, inf
    %1075 = vmin.xlane.f32.xlu0 %v1074
    %v1076 = vpop.xlane.xlu0 %1075
    %v1077 = vcvt.f32.s32 %v1076
    %v1078 = vcvt.f32.s32 %v1072
    %v1079 = vshll.u32 %v1078, 16
    %v1080 = vadd.s32 %v1079, %v1077
    %vm1081 = vcmp.eq.s32.totalorder %v146, %v1080
    %v1082 = vsel %vm1081, 1.0, 0.0
    %1083 = vmatpush.msra.mxu0 0.0
    %1084 = vmatpush.msra.mxu0 0.0
    %1085 = vmatpush.msra.mxu0 0.0
    %1086 = vmatpush.msra.mxu0 0.0
    %1087 = vmatpush.msra.mxu0 0.0
    %1088 = vmatpush.msra.mxu0 0.0
    %1089 = vmatpush.msra.mxu0 0.0
    %1090 = vmatpush.msra.mxu0 0.0
    %1091 = vmatpush.msra.mxu0 0.0
    %1092 = vmatpush.msra.mxu0 0.0
    %1093 = vmatpush.msra.mxu0 0.0
    %1094 = vmatpush.msra.mxu0 0.0
    %1095 = vmatpush.msra.mxu0 %v170
    %1096 = vmatpush.msra.mxu0 %v169
    %1097 = vmatpush.msra.mxu0 %v168
    %1098 = vmatpush.msra.mxu0 %v167
    %1099 = vmatmul.f32.gmra.mxu0 %v993
    %v1100 = vpop.f32.mrf.mxu0
    %v1101 = vadd.f32 0.0, %v1100
    %1102 = vdwg.mxu0
    %1103 = vmatpush.msra.mxu0 %v162
    %1104 = vmatpush.msra.mxu0 %v161
    %1105 = vmatpush.msra.mxu0 %v160
    %1106 = vmatpush.msra.mxu0 %v159
    %1107 = vmatpush.msra.mxu0 %v158
    %1108 = vmatpush.msra.mxu0 %v157
    %1109 = vmatpush.msra.mxu0 %v156
    %1110 = vmatpush.msra.mxu0 %v155
    %1111 = vmatpush.msra.mxu0 %v154
    %1112 = vmatpush.msra.mxu0 %v153
    %1113 = vmatpush.msra.mxu0 %v152
    %1114 = vmatpush.msra.mxu0 %v151
    %1115 = vmatpush.msra.mxu0 %v150
    %1116 = vmatpush.msra.mxu0 %v149
    %1117 = vmatpush.msra.mxu0 %v148
    %1118 = vmatpush.msra.mxu0 %v147
    %1119 = vmatmul.f32.gmra.mxu0 %v1082
    %v1120 = vpop.f32.mrf.mxu0
    %v1121 = vadd.f32 %v1101, %v1120
    %1122 = vdwg.mxu0
    %v1123 = vadd.f32 %v1121, %v177
    %v1124 = vtanh.pop %v1123
    %v1125 = vmul.f32 %v1124, 0.5
    %v1126 = vadd.f32 %v1125, 0.5
    %v1127 = vmul.f32 %v1126, %v963
    %1129 = vrot.lane.b32.xlu0 %v1124, 64
    %v1130 = vpop.permute.xlu0 %1129
    %v1132 = vmul.f32 %v1126, %v1130
    %1134 = vrot.lane.b32.xlu0 %v1132, 32
    %v1135 = vpop.permute.xlu0 %1134
    %v1137 = vadd.f32 %v1127, %v1135
    %v1138 = vtanh.pop %v1137
    %1140 = vrot.lane.b32.xlu0 %v1138, 64
    %v1141 = vpop.permute.xlu0 %1140
    %v1143 = vmul.f32 %v1126, %v1141
    %1144 = vmatpush.msra.mxu0 0.0
    %1145 = vmatpush.msra.mxu0 0.0
    %1146 = vmatpush.msra.mxu0 0.0
    %1147 = vmatpush.msra.mxu0 0.0
    %1148 = vmatpush.msra.mxu0 0.0
    %1149 = vmatpush.msra.mxu0 0.0
    %1150 = vmatpush.msra.mxu0 0.0
    %1151 = vmatpush.msra.mxu0 0.0
    %1152 = vmatpush.msra.mxu0 0.0
    %1153 = vmatpush.msra.mxu0 0.0
    %1154 = vmatpush.msra.mxu0 0.0
    %1155 = vmatpush.msra.mxu0 0.0
    %1156 = vmatpush.msra.mxu0 %v174
    %1157 = vmatpush.msra.mxu0 %v173
    %1158 = vmatpush.msra.mxu0 %v172
    %1159 = vmatpush.msra.mxu0 %v171
    %1160 = vmatmul.f32.gmra.mxu0 %v1039
    %v1161 = vpop.f32.mrf.mxu0
    %v1162 = vadd.f32 0.0, %v1161
    %1163 = vdwg.mxu0
    %1165 = vrot.lane.b32.xlu0 %v1143, 32
    %v1166 = vpop.permute.xlu0 %1165
    %v1167 = vsel %vm199, %v1166, 0
    %1169 = vmatpush.msra.mxu0 0.0
    %1170 = vmatpush.msra.mxu0 0.0
    %1171 = vmatpush.msra.mxu0 0.0
    %1172 = vmatpush.msra.mxu0 0.0
    %1173 = vmatpush.msra.mxu0 0.0
    %1174 = vmatpush.msra.mxu0 0.0
    %1175 = vmatpush.msra.mxu0 0.0
    %1176 = vmatpush.msra.mxu0 0.0
    %1177 = vmatpush.msra.mxu0 0.0
    %1178 = vmatpush.msra.mxu0 0.0
    %1179 = vmatpush.msra.mxu0 0.0
    %1180 = vmatpush.msra.mxu0 0.0
    %1181 = vmatpush.msra.mxu0 %v166
    %1182 = vmatpush.msra.mxu0 %v165
    %1183 = vmatpush.msra.mxu0 %v164
    %1184 = vmatpush.msra.mxu0 %v163
    %1185 = vmatmul.f32.gmra.mxu0 %v1167
    %v1186 = vpop.f32.mrf.mxu0
    %v1187 = vadd.f32 %v1162, %v1186
    %1188 = vdwg.mxu0
    %v1189 = vadd.f32 %v1187, %v181
    %v1190 = vtanh.pop %v1189
    %v1191 = vmul.f32 %v1190, 0.5
    %v1192 = vadd.f32 %v1191, 0.5
    %v1193 = vmul.f32 %v1192, %v1029
    %1195 = vrot.lane.b32.xlu0 %v1190, 64
    %v1196 = vpop.permute.xlu0 %1195
    %v1198 = vmul.f32 %v1192, %v1196
    %1200 = vrot.lane.b32.xlu0 %v1198, 32
    %v1201 = vpop.permute.xlu0 %1200
    %v1203 = vadd.f32 %v1193, %v1201
    %v1204 = vtanh.pop %v1203
    %1206 = vrot.lane.b32.xlu0 %v1204, 64
    %v1207 = vpop.permute.xlu0 %1206
    %v1209 = vmul.f32 %v1192, %v1207
    %1211 = vrot.lane.b32.xlu0 %v1209, 32
    %v1212 = vpop.permute.xlu0 %1211
    %v1213 = vsel %vm199, %v1212, 0
    %1215 = vmatpush.msra.mxu0 0.0
    %1216 = vmatpush.msra.mxu0 0.0
    %1217 = vmatpush.msra.mxu0 0.0
    %1218 = vmatpush.msra.mxu0 0.0
    %1219 = vmatpush.msra.mxu0 0.0
    %1220 = vmatpush.msra.mxu0 0.0
    %1221 = vmatpush.msra.mxu0 0.0
    %1222 = vmatpush.msra.mxu0 0.0
    %1223 = vmatpush.msra.mxu0 0.0
    %1224 = vmatpush.msra.mxu0 0.0
    %1225 = vmatpush.msra.mxu0 0.0
    %1226 = vmatpush.msra.mxu0 0.0
    %1227 = vmatpush.msra.mxu0 %v186
    %1228 = vmatpush.msra.mxu0 %v185
    %1229 = vmatpush.msra.mxu0 %v184
    %1230 = vmatpush.msra.mxu0 %v183
    %1231 = vmatmul.f32.gmra.mxu0 %v1213
    %v1232 = vpop.f32.mrf.mxu0
    %v1233 = vadd.f32 %v189, %v1232
    %1234 = vdwg.mxu0
    %s1235 = scalar_lea.vmem [#allocation14], 40
    %1236 = vst [vmem:[%s1235] sm:$0xff] %v1233
    %1237 = vmax.xlane.f32.xlu0 %v1233
    %v1238 = vpop.xlane.xlu0 %1237
    %vm1239 = vcmp.eq.f32.partialorder %v1233, %v1238
    %v1240 = vsel %vm1239, %v146, 128
    %v1241 = vand.u32 %v1240, 65535
    %v1242 = vshra.s32 %v1240, 16
    %v1243 = vcvt.s32.f32 %v1241
    %v1244 = vcvt.s32.f32 %v1242
    %1245 = vmin.xlane.f32.xlu0 %v1244
    %v1246 = vpop.xlane.xlu0 %1245
    %vm1247 = vcmp.eq.f32.partialorder %v1244, %v1246
    %v1248 = vsel %vm1247, %v1243, inf
    %1249 = vmin.xlane.f32.xlu0 %v1248
    %v1250 = vpop.xlane.xlu0 %1249
    %v1251 = vcvt.f32.s32 %v1250
    %v1252 = vcvt.f32.s32 %v1246
    %v1253 = vshll.u32 %v1252, 16
    %v1254 = vadd.s32 %v1253, %v1251
    %vm1255 = vcmp.eq.s32.totalorder %v146, %v1254
    %v1256 = vsel %vm1255, 1.0, 0.0
    %1257 = vmatpush.msra.mxu0 0.0
    %1258 = vmatpush.msra.mxu0 0.0
    %1259 = vmatpush.msra.mxu0 0.0
    %1260 = vmatpush.msra.mxu0 0.0
    %1261 = vmatpush.msra.mxu0 0.0
    %1262 = vmatpush.msra.mxu0 0.0
    %1263 = vmatpush.msra.mxu0 0.0
    %1264 = vmatpush.msra.mxu0 0.0
    %1265 = vmatpush.msra.mxu0 0.0
    %1266 = vmatpush.msra.mxu0 0.0
    %1267 = vmatpush.msra.mxu0 0.0
    %1268 = vmatpush.msra.mxu0 0.0
    %1269 = vmatpush.msra.mxu0 %v170
    %1270 = vmatpush.msra.mxu0 %v169
    %1271 = vmatpush.msra.mxu0 %v168
    %1272 = vmatpush.msra.mxu0 %v167
    %1273 = vmatmul.f32.gmra.mxu0 %v1167
    %v1274 = vpop.f32.mrf.mxu0
    %v1275 = vadd.f32 0.0, %v1274
    %1276 = vdwg.mxu0
    %1277 = vmatpush.msra.mxu0 %v162
    %1278 = vmatpush.msra.mxu0 %v161
    %1279 = vmatpush.msra.mxu0 %v160
    %1280 = vmatpush.msra.mxu0 %v159
    %1281 = vmatpush.msra.mxu0 %v158
    %1282 = vmatpush.msra.mxu0 %v157
    %1283 = vmatpush.msra.mxu0 %v156
    %1284 = vmatpush.msra.mxu0 %v155
    %1285 = vmatpush.msra.mxu0 %v154
    %1286 = vmatpush.msra.mxu0 %v153
    %1287 = vmatpush.msra.mxu0 %v152
    %1288 = vmatpush.msra.mxu0 %v151
    %1289 = vmatpush.msra.mxu0 %v150
    %1290 = vmatpush.msra.mxu0 %v149
    %1291 = vmatpush.msra.mxu0 %v148
    %1292 = vmatpush.msra.mxu0 %v147
    %1293 = vmatmul.f32.gmra.mxu0 %v1256
    %v1294 = vpop.f32.mrf.mxu0
    %v1295 = vadd.f32 %v1275, %v1294
    %1296 = vdwg.mxu0
    %v1297 = vadd.f32 %v1295, %v177
    %v1298 = vtanh.pop %v1297
    %v1299 = vmul.f32 %v1298, 0.5
    %v1300 = vadd.f32 %v1299, 0.5
    %v1301 = vmul.f32 %v1300, %v1137
    %1303 = vrot.lane.b32.xlu0 %v1298, 64
    %v1304 = vpop.permute.xlu0 %1303
    %v1306 = vmul.f32 %v1300, %v1304
    %1308 = vrot.lane.b32.xlu0 %v1306, 32
    %v1309 = vpop.permute.xlu0 %1308
    %v1311 = vadd.f32 %v1301, %v1309
    %v1312 = vtanh.pop %v1311
    %1314 = vrot.lane.b32.xlu0 %v1312, 64
    %v1315 = vpop.permute.xlu0 %1314
    %v1317 = vmul.f32 %v1300, %v1315
    %1318 = vmatpush.msra.mxu0 0.0
    %1319 = vmatpush.msra.mxu0 0.0
    %1320 = vmatpush.msra.mxu0 0.0
    %1321 = vmatpush.msra.mxu0 0.0
    %1322 = vmatpush.msra.mxu0 0.0
    %1323 = vmatpush.msra.mxu0 0.0
    %1324 = vmatpush.msra.mxu0 0.0
    %1325 = vmatpush.msra.mxu0 0.0
    %1326 = vmatpush.msra.mxu0 0.0
    %1327 = vmatpush.msra.mxu0 0.0
    %1328 = vmatpush.msra.mxu0 0.0
    %1329 = vmatpush.msra.mxu0 0.0
    %1330 = vmatpush.msra.mxu0 %v174
    %1331 = vmatpush.msra.mxu0 %v173
    %1332 = vmatpush.msra.mxu0 %v172
    %1333 = vmatpush.msra.mxu0 %v171
    %1334 = vmatmul.f32.gmra.mxu0 %v1213
    %v1335 = vpop.f32.mrf.mxu0
    %v1336 = vadd.f32 0.0, %v1335
    %1337 = vdwg.mxu0
    %1339 = vrot.lane.b32.xlu0 %v1317, 32
    %v1340 = vpop.permute.xlu0 %1339
    %v1341 = vsel %vm199, %v1340, 0
    %1343 = vmatpush.msra.mxu0 0.0
    %1344 = vmatpush.msra.mxu0 0.0
    %1345 = vmatpush.msra.mxu0 0.0
    %1346 = vmatpush.msra.mxu0 0.0
    %1347 = vmatpush.msra.mxu0 0.0
    %1348 = vmatpush.msra.mxu0 0.0
    %1349 = vmatpush.msra.mxu0 0.0
    %1350 = vmatpush.msra.mxu0 0.0
    %1351 = vmatpush.msra.mxu0 0.0
    %1352 = vmatpush.msra.mxu0 0.0
    %1353 = vmatpush.msra.mxu0 0.0
    %1354 = vmatpush.msra.mxu0 0.0
    %1355 = vmatpush.msra.mxu0 %v166
    %1356 = vmatpush.msra.mxu0 %v165
    %1357 = vmatpush.msra.mxu0 %v164
    %1358 = vmatpush.msra.mxu0 %v163
    %1359 = vmatmul.f32.gmra.mxu0 %v1341
    %v1360 = vpop.f32.mrf.mxu0
    %v1361 = vadd.f32 %v1336, %v1360
    %1362 = vdwg.mxu0
    %v1363 = vadd.f32 %v1361, %v181
    %v1364 = vtanh.pop %v1363
    %v1365 = vmul.f32 %v1364, 0.5
    %v1366 = vadd.f32 %v1365, 0.5
    %v1367 = vmul.f32 %v1366, %v1203
    %1369 = vrot.lane.b32.xlu0 %v1364, 64
    %v1370 = vpop.permute.xlu0 %1369
    %v1372 = vmul.f32 %v1366, %v1370
    %1374 = vrot.lane.b32.xlu0 %v1372, 32
    %v1375 = vpop.permute.xlu0 %1374
    %v1377 = vadd.f32 %v1367, %v1375
    %v1378 = vtanh.pop %v1377
    %1380 = vrot.lane.b32.xlu0 %v1378, 64
    %v1381 = vpop.permute.xlu0 %1380
    %v1383 = vmul.f32 %v1366, %v1381
    %1385 = vrot.lane.b32.xlu0 %v1383, 32
    %v1386 = vpop.permute.xlu0 %1385
    %v1387 = vsel %vm199, %v1386, 0
    %1389 = vmatpush.msra.mxu0 0.0
    %1390 = vmatpush.msra.mxu0 0.0
    %1391 = vmatpush.msra.mxu0 0.0
    %1392 = vmatpush.msra.mxu0 0.0
    %1393 = vmatpush.msra.mxu0 0.0
    %1394 = vmatpush.msra.mxu0 0.0
    %1395 = vmatpush.msra.mxu0 0.0
    %1396 = vmatpush.msra.mxu0 0.0
    %1397 = vmatpush.msra.mxu0 0.0
    %1398 = vmatpush.msra.mxu0 0.0
    %1399 = vmatpush.msra.mxu0 0.0
    %1400 = vmatpush.msra.mxu0 0.0
    %1401 = vmatpush.msra.mxu0 %v186
    %1402 = vmatpush.msra.mxu0 %v185
    %1403 = vmatpush.msra.mxu0 %v184
    %1404 = vmatpush.msra.mxu0 %v183
    %1405 = vmatmul.f32.gmra.mxu0 %v1387
    %v1406 = vpop.f32.mrf.mxu0
    %v1407 = vadd.f32 %v189, %v1406
    %1408 = vdwg.mxu0
    %s1409 = scalar_lea.vmem [#allocation14], 48
    %1410 = vst [vmem:[%s1409] sm:$0xff] %v1407
    %1411 = vmax.xlane.f32.xlu0 %v1407
    %v1412 = vpop.xlane.xlu0 %1411
    %vm1413 = vcmp.eq.f32.partialorder %v1407, %v1412
    %v1414 = vsel %vm1413, %v146, 128
    %v1415 = vand.u32 %v1414, 65535
    %v1416 = vshra.s32 %v1414, 16
    %v1417 = vcvt.s32.f32 %v1415
    %v1418 = vcvt.s32.f32 %v1416
    %1419 = vmin.xlane.f32.xlu0 %v1418
    %v1420 = vpop.xlane.xlu0 %1419
    %vm1421 = vcmp.eq.f32.partialorder %v1418, %v1420
    %v1422 = vsel %vm1421, %v1417, inf
    %1423 = vmin.xlane.f32.xlu0 %v1422
    %v1424 = vpop.xlane.xlu0 %1423
    %v1425 = vcvt.f32.s32 %v1424
    %v1426 = vcvt.f32.s32 %v1420
    %v1427 = vshll.u32 %v1426, 16
    %v1428 = vadd.s32 %v1427, %v1425
    %vm1429 = vcmp.eq.s32.totalorder %v146, %v1428
    %v1430 = vsel %vm1429, 1.0, 0.0
    %1431 = vmatpush.msra.mxu0 0.0
    %1432 = vmatpush.msra.mxu0 0.0
    %1433 = vmatpush.msra.mxu0 0.0
    %1434 = vmatpush.msra.mxu0 0.0
    %1435 = vmatpush.msra.mxu0 0.0
    %1436 = vmatpush.msra.mxu0 0.0
    %1437 = vmatpush.msra.mxu0 0.0
    %1438 = vmatpush.msra.mxu0 0.0
    %1439 = vmatpush.msra.mxu0 0.0
    %1440 = vmatpush.msra.mxu0 0.0
    %1441 = vmatpush.msra.mxu0 0.0
    %1442 = vmatpush.msra.mxu0 0.0
    %1443 = vmatpush.msra.mxu0 %v170
    %1444 = vmatpush.msra.mxu0 %v169
    %1445 = vmatpush.msra.mxu0 %v168
    %1446 = vmatpush.msra.mxu0 %v167
    %1447 = vmatmul.f32.gmra.mxu0 %v1341
    %v1448 = vpop.f32.mrf.mxu0
    %v1449 = vadd.f32 0.0, %v1448
    %1450 = vdwg.mxu0
    %1451 = vmatpush.msra.mxu0 %v162
    %1452 = vmatpush.msra.mxu0 %v161
    %1453 = vmatpush.msra.mxu0 %v160
    %1454 = vmatpush.msra.mxu0 %v159
    %1455 = vmatpush.msra.mxu0 %v158
    %1456 = vmatpush.msra.mxu0 %v157
    %1457 = vmatpush.msra.mxu0 %v156
    %1458 = vmatpush.msra.mxu0 %v155
    %1459 = vmatpush.msra.mxu0 %v154
    %1460 = vmatpush.msra.mxu0 %v153
    %1461 = vmatpush.msra.mxu0 %v152
    %1462 = vmatpush.msra.mxu0 %v151
    %1463 = vmatpush.msra.mxu0 %v150
    %1464 = vmatpush.msra.mxu0 %v149
    %1465 = vmatpush.msra.mxu0 %v148
    %1466 = vmatpush.msra.mxu0 %v147
    %1467 = vmatmul.f32.gmra.mxu0 %v1430
    %v1468 = vpop.f32.mrf.mxu0
    %v1469 = vadd.f32 %v1449, %v1468
    %1470 = vdwg.mxu0
    %v1471 = vadd.f32 %v1469, %v177
    %v1472 = vtanh.pop %v1471
    %v1473 = vmul.f32 %v1472, 0.5
    %v1474 = vadd.f32 %v1473, 0.5
    %v1475 = vmul.f32 %v1474, %v1311
    %1477 = vrot.lane.b32.xlu0 %v1472, 64
    %v1478 = vpop.permute.xlu0 %1477
    %v1480 = vmul.f32 %v1474, %v1478
    %1482 = vrot.lane.b32.xlu0 %v1480, 32
    %v1483 = vpop.permute.xlu0 %1482
    %v1485 = vadd.f32 %v1475, %v1483
    %v1486 = vtanh.pop %v1485
    %1488 = vrot.lane.b32.xlu0 %v1486, 64
    %v1489 = vpop.permute.xlu0 %1488
    %v1491 = vmul.f32 %v1474, %v1489
    %1492 = vmatpush.msra.mxu0 0.0
    %1493 = vmatpush.msra.mxu0 0.0
    %1494 = vmatpush.msra.mxu0 0.0
    %1495 = vmatpush.msra.mxu0 0.0
    %1496 = vmatpush.msra.mxu0 0.0
    %1497 = vmatpush.msra.mxu0 0.0
    %1498 = vmatpush.msra.mxu0 0.0
    %1499 = vmatpush.msra.mxu0 0.0
    %1500 = vmatpush.msra.mxu0 0.0
    %1501 = vmatpush.msra.mxu0 0.0
    %1502 = vmatpush.msra.mxu0 0.0
    %1503 = vmatpush.msra.mxu0 0.0
    %1504 = vmatpush.msra.mxu0 %v174
    %1505 = vmatpush.msra.mxu0 %v173
    %1506 = vmatpush.msra.mxu0 %v172
    %1507 = vmatpush.msra.mxu0 %v171
    %1508 = vmatmul.f32.gmra.mxu0 %v1387
    %v1509 = vpop.f32.mrf.mxu0
    %v1510 = vadd.f32 0.0, %v1509
    %1511 = vdwg.mxu0
    %1513 = vrot.lane.b32.xlu0 %v1491, 32
    %v1514 = vpop.permute.xlu0 %1513
    %v1515 = vsel %vm199, %v1514, 0
    %1517 = vmatpush.msra.mxu0 0.0
    %1518 = vmatpush.msra.mxu0 0.0
    %1519 = vmatpush.msra.mxu0 0.0
    %1520 = vmatpush.msra.mxu0 0.0
    %1521 = vmatpush.msra.mxu0 0.0
    %1522 = vmatpush.msra.mxu0 0.0
    %1523 = vmatpush.msra.mxu0 0.0
    %1524 = vmatpush.msra.mxu0 0.0
    %1525 = vmatpush.msra.mxu0 0.0
    %1526 = vmatpush.msra.mxu0 0.0
    %1527 = vmatpush.msra.mxu0 0.0
    %1528 = vmatpush.msra.mxu0 0.0
    %1529 = vmatpush.msra.mxu0 %v166
    %1530 = vmatpush.msra.mxu0 %v165
    %1531 = vmatpush.msra.mxu0 %v164
    %1532 = vmatpush.msra.mxu0 %v163
    %1533 = vmatmul.f32.gmra.mxu0 %v1515
    %v1534 = vpop.f32.mrf.mxu0
    %v1535 = vadd.f32 %v1510, %v1534
    %1536 = vdwg.mxu0
    %v1537 = vadd.f32 %v1535, %v181
    %v1538 = vtanh.pop %v1537
    %v1539 = vmul.f32 %v1538, 0.5
    %v1540 = vadd.f32 %v1539, 0.5
    %v1541 = vmul.f32 %v1540, %v1377
    %1543 = vrot.lane.b32.xlu0 %v1538, 64
    %v1544 = vpop.permute.xlu0 %1543
    %v1546 = vmul.f32 %v1540, %v1544
    %1548 = vrot.lane.b32.xlu0 %v1546, 32
    %v1549 = vpop.permute.xlu0 %1548
    %v1551 = vadd.f32 %v1541, %v1549
    %v1552 = vtanh.pop %v1551
    %1554 = vrot.lane.b32.xlu0 %v1552, 64
    %v1555 = vpop.permute.xlu0 %1554
    %v1557 = vmul.f32 %v1540, %v1555
    %1559 = vrot.lane.b32.xlu0 %v1557, 32
    %v1560 = vpop.permute.xlu0 %1559
    %v1561 = vsel %vm199, %v1560, 0
    %1563 = vmatpush.msra.mxu0 0.0
    %1564 = vmatpush.msra.mxu0 0.0
    %1565 = vmatpush.msra.mxu0 0.0
    %1566 = vmatpush.msra.mxu0 0.0
    %1567 = vmatpush.msra.mxu0 0.0
    %1568 = vmatpush.msra.mxu0 0.0
    %1569 = vmatpush.msra.mxu0 0.0
    %1570 = vmatpush.msra.mxu0 0.0
    %1571 = vmatpush.msra.mxu0 0.0
    %1572 = vmatpush.msra.mxu0 0.0
    %1573 = vmatpush.msra.mxu0 0.0
    %1574 = vmatpush.msra.mxu0 0.0
    %1575 = vmatpush.msra.mxu0 %v186
    %1576 = vmatpush.msra.mxu0 %v185
    %1577 = vmatpush.msra.mxu0 %v184
    %1578 = vmatpush.msra.mxu0 %v183
    %1579 = vmatmul.f32.gmra.mxu0 %v1561
    %v1580 = vpop.f32.mrf.mxu0
    %v1581 = vadd.f32 %v189, %v1580
    %1582 = vdwg.mxu0
    %s1583 = scalar_lea.vmem [#allocation14], 56
    %1584 = vst [vmem:[%s1583] sm:$0xff] %v1581
    // Predicated region
    $region70: #{tpu_custom_call.1} parent=1 // pred_check
      _
    $region71: #{tpu_custom_call.1} parent=1 // pred_check_branch
      %1586 = sbr.rel (0) target = $region73
    $region72: #{tpu_custom_call.1} parent=1 // pred_region
      %1588 = vsyncadd [#allocation4], 0
      %s1589 = sshll.u32 [#allocation14], 4
      %s1590 = int_to_ptr.vmem [resolvable:$true] %s1589
      %s1591 = sshll.u32 %s10, 4
      %s1592 = int_to_ptr.hbm [resolvable:$true] %s1591
      %1597 = dma.vmem_to_hbm [thread:$0]  %s1590, 1024, %s1592, [#allocation4], 128, 128, 8
    $region73: #{tpu_custom_call.1} parent=1 // pred_fallthru
      _
    // Predicated region
    $region74: #{tpu_custom_call.1} parent=1 // pred_check
      _
    $region75: #{tpu_custom_call.1} parent=1 // pred_check_branch
      %1599 = sbr.rel (0) target = $region77
    $region76: #{tpu_custom_call.1} parent=1 // pred_region
      %1601 = dma.done [#allocation4], 1024
    $region77: #{tpu_custom_call.1} parent=1 // pred_fallthru
      _
    %1602 = vsyncpa [#allocation3], 1
    %1603 = vsyncpa [#allocation6], 1
    %1604 = vsyncpa [#allocation9], 1
    %1605 = vsyncpa [#allocation12], 1
    %1606 = vsyncpa [#allocation4], 1

</llo_original>
